<compile_context>
chip_gen: v7x
topology: tpu7x:2x2x1
jax: 0.10.0
libtpu: 0.0.40
codegen_flags: <defaults>
</compile_context>

<pallas_src>
import functools

import jax
import jax.numpy as jnp
from jax.experimental import pallas as pl
from jax.experimental.pallas import tpu as pltpu


# ----------------------------------------------------------------------------
# Pallas kernel: one GATConv layer, one target-node block per grid step
# ----------------------------------------------------------------------------
def gat_layer_kernel(xt_ref, xs_ref, w_ref, asrc_ref, adst_ref, bias_ref,
                     adj_ref, out_ref, *, apply_relu):
    heads = w_ref.shape[0]
    n_src, f_in = xs_ref.shape
    n_tgt = xt_ref.shape[0]

    # bf16 operands for the MXU; accumulation stays f32.
    w = w_ref[...].astype(jnp.bfloat16)                          # (H, F, C)
    xs = xs_ref[...].astype(jnp.bfloat16)                        # (Ns, F)
    xt = xt_ref[...].astype(jnp.bfloat16)                        # (Tt, F)

    # Head-batched projection, batch (head) dim leading on both operands.
    hs = jnp.einsum("hnf,hfc->hnc",
                    jnp.broadcast_to(xs[None], (heads, n_src, f_in)), w,
                    preferred_element_type=jnp.float32)           # (H, Ns, C)
    ht = jnp.einsum("hnf,hfc->hnc",
                    jnp.broadcast_to(xt[None], (heads, n_tgt, f_in)), w,
                    preferred_element_type=jnp.float32)           # (H, Tt, C)

    # Attention coefficients for ALL heads at once (VPU multiply + lane reduce).
    a_src = jnp.sum(hs * asrc_ref[...][:, None, :], axis=-1)      # (H, Ns)
    a_dst = jnp.sum(ht * adst_ref[...][:, None, :], axis=-1)      # (H, Tt)

    # logits[h, t, s] = a_dst[h, t] + a_src[h, s]; LeakyReLU(0.2); mask.
    logits = a_dst[:, :, None] + a_src[:, None, :]                # (H, Tt, Ns)
    logits = jnp.where(logits > 0, logits, 0.2 * logits)
    mask = adj_ref[...].astype(jnp.int32) != 0                    # (1, Tt, Ns)
    logits = jnp.where(mask, logits, jnp.float32(-1e30))

    # Softmax over sources. Every target row has a self-loop so the row max is
    # finite and exp() of masked entries is exactly 0 -> no second mask pass.
    m = jnp.max(logits, axis=-1, keepdims=True)
    p = jnp.exp(logits - m)
    denom = jnp.sum(p, axis=-1, keepdims=True)
    attn = p * pl.reciprocal(denom, approx=True)                  # (H, Tt, Ns)

    # Head-batched aggregation: out[h, t, :] = sum_s attn[h, t, s] * hs[h, s, :]
    out = jnp.einsum("htn,hnc->htc",
                     attn.astype(jnp.bfloat16), hs.astype(jnp.bfloat16),
                     preferred_element_type=jnp.float32)          # (H, Tt, C)
    out = out + bias_ref[...]                                     # (H, 1, C) bcast
    if apply_relu:
        out = jnp.maximum(out, 0.0)
    out_ref[...] = out


def gat_conv(x, adj_i8, w, att_src, att_dst, bias, *, heads, out_ch,
             apply_relu, block_t=None):
    """One GATConv layer (concat=True, negative_slope=0.2, add_self_loops)."""
    n, f_in = x.shape
    if block_t is None:
        block_t = n if n <= 128 else 128
    assert n % block_t == 0 and block_t % 8 == 0
    n_blocks = n // block_t

    # Parameter / input re-layouts (done once, plain XLA, outside the kernel):
    #   * head-major weight (H, F, C) so the kernel runs head-batched matmuls
    #   * bias as (H, 1, C), adjacency rows grouped per target block (int8)
    w_heads = jnp.transpose(w.reshape(f_in, heads, out_ch), (1, 0, 2))
    b_heads = bias.reshape(heads, 1, out_ch)
    adj_blocks = adj_i8.reshape(n_blocks, block_t, n)

    kernel = functools.partial(gat_layer_kernel, apply_relu=apply_relu)
    out_hnc = pl.pallas_call(
        kernel,
        out_shape=jax.ShapeDtypeStruct((heads, n, out_ch), jnp.float32),
        grid=(n_blocks,),
        in_specs=[
            pl.BlockSpec((block_t, f_in), lambda i: (i, 0)),          # x, target rows
            pl.BlockSpec((n, f_in), lambda i: (0, 0)),                # x, all sources
            pl.BlockSpec((heads, f_in, out_ch), lambda i: (0, 0, 0)), # W (head-major)
            pl.BlockSpec((heads, out_ch), lambda i: (0, 0)),          # att_src
            pl.BlockSpec((heads, out_ch), lambda i: (0, 0)),          # att_dst
            pl.BlockSpec((heads, 1, out_ch), lambda i: (0, 0, 0)),    # bias
            pl.BlockSpec((1, block_t, n), lambda i: (i, 0, 0)),       # adj rows (int8)
        ],
        out_specs=pl.BlockSpec((heads, block_t, out_ch), lambda i: (0, i, 0)),
        compiler_params=pltpu.CompilerParams(
            dimension_semantics=("parallel",)),
    )(x, x, w_heads, att_src, att_dst, b_heads, adj_blocks)

    # (H, N, C) -> lane-dense (N, H*C) for the next layer / final output.
    return jnp.transpose(out_hnc, (1, 0, 2)).reshape(n, heads * out_ch)


# ----------------------------------------------------------------------------
# Plain-JAX glue: parameters, dense adjacency, 2-layer GAT forward, reference
# ----------------------------------------------------------------------------
def glorot(key, shape):
    fan = shape[0] + shape[-1]
    lim = jnp.sqrt(6.0 / fan)
    return jax.random.uniform(key, shape, jnp.float32, -lim, lim)


def make_params(key, in_ch, hid_ch, out_ch, heads):
    ks = jax.random.split(key, 6)
    return {
        "w1": glorot(ks[0], (in_ch, heads * hid_ch)),
        "as1": glorot(ks[1], (heads, hid_ch)),
        "ad1": glorot(ks[2], (heads, hid_ch)),
        "b1": jnp.zeros((1, heads * hid_ch), jnp.float32),
        "w2": glorot(ks[3], (heads * hid_ch, out_ch)),
        "as2": glorot(ks[4], (1, out_ch)),
        "ad2": glorot(ks[5], (1, out_ch)),
        "b2": jnp.zeros((1, out_ch), jnp.float32),
    }


def dense_adj(edge_index, n):
    src, dst = edge_index[0], edge_index[1]
    adj = jnp.zeros((n, n), jnp.int8).at[dst, src].set(1)
    idx = jnp.arange(n)
    return adj.at[idx, idx].set(1)          # add self-loops (PyG default)


def gat_forward(params, x, adj_i8, *, heads, hid_ch, out_ch, block_t=None):
    h = gat_conv(x, adj_i8, params["w1"], params["as1"], params["ad1"],
                 params["b1"], heads=heads, out_ch=hid_ch, apply_relu=True,
                 block_t=block_t)
    return gat_conv(h, adj_i8, params["w2"], params["as2"], params["ad2"],
                    params["b2"], heads=1, out_ch=out_ch, apply_relu=False,
                    block_t=block_t)


def gat_conv_ref(x, adj, w, att_src, att_dst, bias, *, heads, out_ch,
                 apply_relu):
    n = x.shape[0]
    h = (x @ w).reshape(n, heads, out_ch)
    a_s = jnp.einsum("nhc,hc->hn", h, att_src)
    a_d = jnp.einsum("nhc,hc->hn", h, att_dst)
    logits = a_d[:, :, None] + a_s[:, None, :]            # (H, Nt, Ns)
    logits = jnp.where(logits > 0, logits, 0.2 * logits)
    mask = adj[None] > 0
    logits = jnp.where(mask, logits, -1e30)
    p = jnp.exp(logits - jnp.max(logits, -1, keepdims=True))
    p = jnp.where(mask, p, 0.0)
    attn = p / jnp.sum(p, -1, keepdims=True)
    out = jnp.einsum("hts,shc->thc", attn, h).reshape(n, heads * out_ch) + bias
    return jnp.maximum(out, 0.0) if apply_relu else out


def gat_forward_ref(params, x, adj, *, heads, hid_ch, out_ch):
    h = gat_conv_ref(x, adj, params["w1"], params["as1"], params["ad1"],
                     params["b1"], heads=heads, out_ch=hid_ch, apply_relu=True)
    return gat_conv_ref(h, adj, params["w2"], params["as2"], params["ad2"],
                        params["b2"], heads=1, out_ch=out_ch, apply_relu=False)


if __name__ == "__main__":
    N, IN_CH, HID_CH, OUT_CH, HEADS = 16, 16, 8, 8, 8

    key = jax.random.PRNGKey(0)
    kx, ke1, ke2, kp = jax.random.split(key, 4)

    x = jax.random.normal(kx, (N, IN_CH), jnp.float32)

    # deterministic small graph: bidirectional ring + 16 random edges
    idx = jnp.arange(N, dtype=jnp.int32)
    src = jnp.concatenate([idx, (idx + 1) % N,
                           jax.random.randint(ke1, (16,), 0, N, jnp.int32)])
    dst = jnp.concatenate([(idx + 1) % N, idx,
                           jax.random.randint(ke2, (16,), 0, N, jnp.int32)])
    edge_index = jnp.stack([src, dst])        # (2, 48)

    adj = dense_adj(edge_index, N)            # (N, N) int8, with self-loops
    params = make_params(kp, IN_CH, HID_CH, OUT_CH, HEADS)

    # block_t=8 -> a 2-step "parallel" grid per layer, exercising the tiled path.
    out = gat_forward(params, x, adj, heads=HEADS, hid_ch=HID_CH,
                      out_ch=OUT_CH, block_t=8)
    out = jax.block_until_ready(out)

    ref = gat_forward_ref(params, x, adj, heads=HEADS, hid_ch=HID_CH,
                          out_ch=OUT_CH)
    assert out.shape == (N, OUT_CH)
    # Kernel matmuls use bf16 operands (f32 accumulation) and the softmax uses
    # the approximate EUP reciprocal, so compare loosely against the f32 reference.
    assert jnp.allclose(out, ref, atol=6e-2, rtol=6e-2)
    print("KERNEL_OK")
</pallas_src>

<mosaic_0001>
module attributes {stable_mosaic.version = 11 : i64} {
  func.func @gat_layer_kernel(%arg0: i32, %arg1: memref<8x16xf32, #tpu.memory_space<vmem>>, %arg2: memref<16x16xf32, #tpu.memory_space<vmem>>, %arg3: memref<8x16x8xf32, #tpu.memory_space<vmem>>, %arg4: memref<8x8xf32, #tpu.memory_space<vmem>>, %arg5: memref<8x8xf32, #tpu.memory_space<vmem>>, %arg6: memref<8x1x8xf32, #tpu.memory_space<vmem>>, %arg7: memref<1x8x16xi8, #tpu.memory_space<vmem>>, %arg8: memref<8x8x8xf32, #tpu.memory_space<vmem>>) attributes {dimension_semantics = [#tpu.dimension_semantics<parallel>], iteration_bounds = array<i64: 2>, scalar_prefetch = 0 : i64, scratch_operands = 0 : i64, tpu.core_type = #tpu.core_type<tc>, window_params = [{transform_indices = @transform_0, window_bounds = array<i64: 8, 16>}, {pipeline_mode = #tpu.pipeline_mode<synchronous>, transform_indices = @transform_1, window_bounds = array<i64: 16, 16>}, {pipeline_mode = #tpu.pipeline_mode<synchronous>, transform_indices = @transform_2, window_bounds = array<i64: 8, 16, 8>}, {pipeline_mode = #tpu.pipeline_mode<synchronous>, transform_indices = @transform_3, window_bounds = array<i64: 8, 8>}, {pipeline_mode = #tpu.pipeline_mode<synchronous>, transform_indices = @transform_4, window_bounds = array<i64: 8, 8>}, {pipeline_mode = #tpu.pipeline_mode<synchronous>, transform_indices = @transform_5, window_bounds = array<i64: 8, 1, 8>}, {transform_indices = @transform_6, window_bounds = array<i64: 1, 8, 16>}, {transform_indices = @transform_7, window_bounds = array<i64: 8, 8, 8>}]} {
    %c0 = arith.constant 0 : index
    %c0_0 = arith.constant 0 : index
    %c0_1 = arith.constant 0 : index
    %0 = vector.load %arg3[%c0, %c0_0, %c0_1] : memref<8x16x8xf32, #tpu.memory_space<vmem>>, vector<8x16x8xf32>
    %1 = arith.truncf %0 : vector<8x16x8xf32> to vector<8x16x8xbf16>
    %c0_2 = arith.constant 0 : index
    %c0_3 = arith.constant 0 : index
    %2 = vector.load %arg2[%c0_2, %c0_3] : memref<16x16xf32, #tpu.memory_space<vmem>>, vector<16x16xf32>
    %3 = arith.truncf %2 : vector<16x16xf32> to vector<16x16xbf16>
    %c0_4 = arith.constant 0 : index
    %c0_5 = arith.constant 0 : index
    %4 = vector.load %arg1[%c0_4, %c0_5] : memref<8x16xf32, #tpu.memory_space<vmem>>, vector<8x16xf32>
    %5 = arith.truncf %4 : vector<8x16xf32> to vector<8x16xbf16>
    %6 = vector.shape_cast %3 : vector<16x16xbf16> to vector<1x16x16xbf16>
    %7 = vector.shape_cast %6 : vector<1x16x16xbf16> to vector<1x16x16xbf16>
    %8 = vector.broadcast %7 : vector<1x16x16xbf16> to vector<8x16x16xbf16>
    "tpu.trace_start"() <{level = 10 : i32, message = "hnf,hfc->hnc"}> : () -> ()
    %cst = arith.constant dense<0.000000e+00> : vector<8x16x8xf32>
    %9 = tpu.matmul %8, %1, %cst {dimension_numbers = #tpu.dot_dimension_numbers<[2], [1], [1], [2], [0, 0, 0, 1, 1, 2], [0], [0]>} : vector<8x16x16xbf16>, vector<8x16x8xbf16>, vector<8x16x8xf32> -> vector<8x16x8xf32>
    "tpu.trace_stop"() : () -> ()
    %10 = vector.shape_cast %5 : vector<8x16xbf16> to vector<1x8x16xbf16>
    %11 = vector.shape_cast %10 : vector<1x8x16xbf16> to vector<1x8x16xbf16>
    %12 = vector.broadcast %11 : vector<1x8x16xbf16> to vector<8x8x16xbf16>
    "tpu.trace_start"() <{level = 10 : i32, message = "hnf,hfc->hnc"}> : () -> ()
    %cst_6 = arith.constant dense<0.000000e+00> : vector<8x8x8xf32>
    %13 = tpu.matmul %12, %1, %cst_6 {dimension_numbers = #tpu.dot_dimension_numbers<[2], [1], [1], [2], [0, 0, 0, 1, 1, 2], [0], [0]>} : vector<8x8x16xbf16>, vector<8x16x8xbf16>, vector<8x8x8xf32> -> vector<8x8x8xf32>
    "tpu.trace_stop"() : () -> ()
    %c0_7 = arith.constant 0 : index
    %c0_8 = arith.constant 0 : index
    %14 = vector.load %arg4[%c0_7, %c0_8] : memref<8x8xf32, #tpu.memory_space<vmem>>, vector<8x8xf32>
    %15 = vector.shape_cast %14 : vector<8x8xf32> to vector<8x1x8xf32>
    %16 = vector.broadcast %15 : vector<8x1x8xf32> to vector<8x16x8xf32>
    %17 = arith.mulf %9, %16 : vector<8x16x8xf32>
    %cst_9 = arith.constant dense<0.000000e+00> : vector<8x16xf32>
    %18 = vector.multi_reduction <add>, %17, %cst_9 [2] : vector<8x16x8xf32> to vector<8x16xf32>
    %c0_10 = arith.constant 0 : index
    %c0_11 = arith.constant 0 : index
    %19 = vector.load %arg5[%c0_10, %c0_11] : memref<8x8xf32, #tpu.memory_space<vmem>>, vector<8x8xf32>
    %20 = vector.shape_cast %19 : vector<8x8xf32> to vector<8x1x8xf32>
    %21 = vector.broadcast %20 : vector<8x1x8xf32> to vector<8x8x8xf32>
    %22 = arith.mulf %13, %21 : vector<8x8x8xf32>
    %cst_12 = arith.constant dense<0.000000e+00> : vector<8x8xf32>
    %23 = vector.multi_reduction <add>, %22, %cst_12 [2] : vector<8x8x8xf32> to vector<8x8xf32>
    %24 = vector.shape_cast %23 : vector<8x8xf32> to vector<8x8x1xf32>
    %25 = vector.shape_cast %18 : vector<8x16xf32> to vector<8x1x16xf32>
    %26 = vector.broadcast %24 : vector<8x8x1xf32> to vector<8x8x16xf32>
    %27 = vector.broadcast %25 : vector<8x1x16xf32> to vector<8x8x16xf32>
    %28 = arith.addf %26, %27 : vector<8x8x16xf32>
    %cst_13 = arith.constant 0.000000e+00 : f32
    %29 = vector.broadcast %cst_13 : f32 to vector<8x8x16xf32>
    %30 = arith.cmpf ogt, %28, %29 : vector<8x8x16xf32>
    %cst_14 = arith.constant 2.000000e-01 : f32
    %31 = vector.broadcast %cst_14 : f32 to vector<8x8x16xf32>
    %32 = arith.mulf %31, %28 : vector<8x8x16xf32>
    %33 = arith.select %30, %28, %32 : vector<8x8x16xi1>, vector<8x8x16xf32>
    %c0_15 = arith.constant 0 : index
    %c0_16 = arith.constant 0 : index
    %c0_17 = arith.constant 0 : index
    %34 = vector.load %arg7[%c0_15, %c0_16, %c0_17] : memref<1x8x16xi8, #tpu.memory_space<vmem>>, vector<1x8x16xi8>
    %35 = arith.extsi %34 : vector<1x8x16xi8> to vector<1x8x16xi32>
    %c0_i32 = arith.constant 0 : i32
    %36 = vector.broadcast %c0_i32 : i32 to vector<1x8x16xi32>
    %37 = arith.cmpi ne, %35, %36 : vector<1x8x16xi32>
    %cst_18 = arith.constant -1.000000e+30 : f32
    %38 = vector.shape_cast %37 : vector<1x8x16xi1> to vector<1x8x16xi1>
    %39 = vector.broadcast %38 : vector<1x8x16xi1> to vector<8x8x16xi1>
    %40 = vector.broadcast %cst_18 : f32 to vector<8x8x16xf32>
    %41 = arith.select %39, %33, %40 : vector<8x8x16xi1>, vector<8x8x16xf32>
    %cst_19 = arith.constant dense<0xFF800000> : vector<8x8xf32>
    %42 = vector.multi_reduction <maximumf>, %41, %cst_19 [2] : vector<8x8x16xf32> to vector<8x8xf32>
    %43 = vector.shape_cast %42 : vector<8x8xf32> to vector<8x8x1xf32>
    %44 = vector.broadcast %43 : vector<8x8x1xf32> to vector<8x8x16xf32>
    %45 = arith.subf %41, %44 : vector<8x8x16xf32>
    %46 = math.exp %45 : vector<8x8x16xf32>
    %cst_20 = arith.constant dense<0.000000e+00> : vector<8x8xf32>
    %47 = vector.multi_reduction <add>, %46, %cst_20 [2] : vector<8x8x16xf32> to vector<8x8xf32>
    %48 = vector.shape_cast %47 : vector<8x8xf32> to vector<8x8x1xf32>
    %49 = tpu.reciprocal %48 {approx = true} : vector<8x8x1xf32> -> vector<8x8x1xf32>
    %50 = vector.broadcast %49 : vector<8x8x1xf32> to vector<8x8x16xf32>
    %51 = arith.mulf %46, %50 : vector<8x8x16xf32>
    %52 = arith.truncf %51 : vector<8x8x16xf32> to vector<8x8x16xbf16>
    %53 = arith.truncf %9 : vector<8x16x8xf32> to vector<8x16x8xbf16>
    "tpu.trace_start"() <{level = 10 : i32, message = "htn,hnc->htc"}> : () -> ()
    %cst_21 = arith.constant dense<0.000000e+00> : vector<8x8x8xf32>
    %54 = tpu.matmul %52, %53, %cst_21 {dimension_numbers = #tpu.dot_dimension_numbers<[2], [1], [1], [2], [0, 0, 0, 1, 1, 2], [0], [0]>} : vector<8x8x16xbf16>, vector<8x16x8xbf16>, vector<8x8x8xf32> -> vector<8x8x8xf32>
    "tpu.trace_stop"() : () -> ()
    %c0_22 = arith.constant 0 : index
    %c0_23 = arith.constant 0 : index
    %c0_24 = arith.constant 0 : index
    %55 = vector.load %arg6[%c0_22, %c0_23, %c0_24] : memref<8x1x8xf32, #tpu.memory_space<vmem>>, vector<8x1x8xf32>
    %56 = vector.broadcast %55 : vector<8x1x8xf32> to vector<8x8x8xf32>
    %57 = arith.addf %54, %56 : vector<8x8x8xf32>
    %cst_25 = arith.constant 0.000000e+00 : f32
    %58 = vector.broadcast %cst_25 : f32 to vector<8x8x8xf32>
    %59 = arith.maximumf %57, %58 : vector<8x8x8xf32>
    %c0_26 = arith.constant 0 : index
    %c0_27 = arith.constant 0 : index
    %c0_28 = arith.constant 0 : index
    %60 = vector.load %arg8[%c0_26, %c0_27, %c0_28] : memref<8x8x8xf32, #tpu.memory_space<vmem>>, vector<8x8x8xf32>
    tpu.vector_store %arg8[%c0_26, %c0_27, %c0_28], %59 {strides = array<i32>} : memref<8x8x8xf32, #tpu.memory_space<vmem>>, vector<8x8x8xf32>,
    return
  }
  func.func @transform_0(%arg0: i32) -> (i32, i32) {
    %c0_i32 = arith.constant 0 : i32
    %c0_i32_0 = arith.constant 0 : i32
    return %arg0, %c0_i32 : i32, i32
  }
  func.func @transform_1(%arg0: i32) -> (i32, i32) {
    %c0_i32 = arith.constant 0 : i32
    %c0_i32_0 = arith.constant 0 : i32
    %c0_i32_1 = arith.constant 0 : i32
    return %c0_i32, %c0_i32_0 : i32, i32
  }
  func.func @transform_2(%arg0: i32) -> (i32, i32, i32) {
    %c0_i32 = arith.constant 0 : i32
    %c0_i32_0 = arith.constant 0 : i32
    %c0_i32_1 = arith.constant 0 : i32
    %c0_i32_2 = arith.constant 0 : i32
    return %c0_i32, %c0_i32_0, %c0_i32_1 : i32, i32, i32
  }
  func.func @transform_3(%arg0: i32) -> (i32, i32) {
    %c0_i32 = arith.constant 0 : i32
    %c0_i32_0 = arith.constant 0 : i32
    %c0_i32_1 = arith.constant 0 : i32
    return %c0_i32, %c0_i32_0 : i32, i32
  }
  func.func @transform_4(%arg0: i32) -> (i32, i32) {
    %c0_i32 = arith.constant 0 : i32
    %c0_i32_0 = arith.constant 0 : i32
    %c0_i32_1 = arith.constant 0 : i32
    return %c0_i32, %c0_i32_0 : i32, i32
  }
  func.func @transform_5(%arg0: i32) -> (i32, i32, i32) {
    %c0_i32 = arith.constant 0 : i32
    %c0_i32_0 = arith.constant 0 : i32
    %c0_i32_1 = arith.constant 0 : i32
    %c0_i32_2 = arith.constant 0 : i32
    return %c0_i32, %c0_i32_0, %c0_i32_1 : i32, i32, i32
  }
  func.func @transform_6(%arg0: i32) -> (i32, i32, i32) {
    %c0_i32 = arith.constant 0 : i32
    %c0_i32_0 = arith.constant 0 : i32
    %c0_i32_1 = arith.constant 0 : i32
    return %arg0, %c0_i32, %c0_i32_0 : i32, i32, i32
  }
  func.func @transform_7(%arg0: i32) -> (i32, i32, i32) {
    %c0_i32 = arith.constant 0 : i32
    %c0_i32_0 = arith.constant 0 : i32
    %c0_i32_1 = arith.constant 0 : i32
    return %c0_i32, %arg0, %c0_i32_0 : i32, i32, i32
  }
}

</mosaic_0001>

<llo_original>
// kernel: tpu_custom_call.1
$region0: #{tpu_custom_call.1}
  #allocation0 [shape = 'u32[]', space=smem, size = 0x4, offset = 0x4, fixed_abs, tag = 'smem constant byte address 0x4 - core index']
  #allocation1 [shape = 'u32[144,128]{1,0:T(1,128)}', space=vmem, size = 0x12000, scoped, tag = 'internal scratch']
  %s0 = inlined_call_operand.vmem [shape: f32[16,16], index: 0, kind: input, shape index: {}]
  %s1 = inlined_call_operand.vmem [shape: f32[16,16], index: 1, kind: input, shape index: {}]
  %s2 = inlined_call_operand.vmem [shape: f32[8,16,8], index: 2, kind: input, shape index: {}]
  %s3 = inlined_call_operand.vmem [shape: f32[8,8], index: 3, kind: input, shape index: {}]
  %s4 = inlined_call_operand.vmem [shape: f32[8,8], index: 4, kind: input, shape index: {}]
  %s5 = inlined_call_operand.vmem [shape: f32[8,1,8], index: 5, kind: input, shape index: {}]
  %s6 = inlined_call_operand.vmem [shape: s8[2,8,16], index: 6, kind: input, shape index: {}]
  %s7 = inlined_call_operand.vmem [shape: f32[8,16,8], index: 7, kind: output, shape index: {}]
  %s8 = sld [smem:[#allocation0]]
  $region95: #{tpu_custom_call.1} parent=0
    _
  %s10 = ssub.s32 1, %s8
  %s11 = scalar_select 0, %s10, %s8
  $region1: #{tpu_custom_call.1} parent=0
    #allocation2 [shape = 'u8[65536]{0}', space=vmem, size = 0x10000, scoped, tag = 'output window, operand 0']
    loop: start=0, step=1, limit=4
    $region2: #{tpu_custom_call.1} parent=1 // loop_pre_header
      _
    $region3: #{tpu_custom_call.1} parent=1 // loop_header
      %s13 = sphi 0, %s17
      %p14 = scmp.ge.s32.totalorder %s13, 4
      %s23 = sphi 0, %s25
      %s26 = sphi 0, %s23
      %s27 = sphi 0, %s26
      %s43 = sphi 0, %s27
      %s47 = sphi 0, %s47
      %s49 = sphi 0, %s47
      %s50 = sphi 0, %s49
      %s64 = sphi 0, %s50
      %s68 = sphi 0, %s68
      %s70 = sphi 0, %s68
      %s71 = sphi 0, %s70
      %s85 = sphi 0, %s71
      %s89 = sphi 0, %s89
      %s91 = sphi 0, %s89
      %s92 = sphi 0, %s91
      %s106 = sphi 0, %s92
      %s110 = sphi 0, %s110
      %s112 = sphi 0, %s110
      %s113 = sphi 0, %s112
      %s127 = sphi 0, %s113
      %s131 = sphi 0, %s131
      %s133 = sphi 0, %s131
      %s134 = sphi 0, %s133
      %s148 = sphi 0, %s134
      %s154 = sphi 0, %s156
      %s157 = sphi 0, %s154
      %s158 = sphi 0, %s157
      %s174 = sphi 0, %s158
      %s180 = sphi 0, %s182
      %s183 = sphi 0, %s180
      %s184 = sphi 0, %s183
      %s200 = sphi 0, %s184
    $region4: #{tpu_custom_call.1} parent=1 // loop_header_branch
      %16 = sbr.rel (%p14) target = $region8
    $region5: #{tpu_custom_call.1} parent=1 // loop_body
      %s18 = ssub.s32 %s13, 1
      %s19 = ssub.s32 %s13, 2
      %s20 = sadd.s32 %s13, 1
      %s21 = ssub.s32 %s13, %s20
      %p22 = scmp.eq.s32.totalorder %s21, 0
      %s24 = sadd.s32 %s23, 1
      %s25 = scalar_select %p22, %s23, %s24
      %p28 = pneg %p22
      %p29 = scmp.eq.s32.totalorder %s13, 1
      %p30 = por %p28, %p29
      %p31 = scmp.ne.s32.totalorder %s23, %s26
      %p32 = scmp.eq.s32.totalorder %s13, 0
      %p33 = por %p31, %p32
      %p34 = scmp.ne.s32.totalorder %s23, %s26
      %p35 = scmp.eq.s32.totalorder %s18, 1
      %p36 = por %p34, %p35
      %p37 = scmp.ne.s32.totalorder %s26, %s27
      %p38 = scmp.eq.s32.totalorder %s18, 0
      %p39 = por %p37, %p38
      %p40 = scmp.ne.s32.totalorder %s26, %s27
      %p41 = scmp.eq.s32.totalorder %s19, 1
      %p42 = por %p40, %p41
      %p44 = scmp.ne.s32.totalorder %s27, %s43
      %p45 = scmp.eq.s32.totalorder %s19, 0
      %p46 = por %p44, %p45
      %s48 = sadd.s32 %s47, 1
      %p51 = scmp.eq.s32.totalorder %s13, 1
      %p52 = scmp.ne.s32.totalorder %s47, %s49
      %p53 = scmp.eq.s32.totalorder %s13, 0
      %p54 = por %p52, %p53
      %p55 = scmp.ne.s32.totalorder %s47, %s49
      %p56 = scmp.eq.s32.totalorder %s18, 1
      %p57 = por %p55, %p56
      %p58 = scmp.ne.s32.totalorder %s49, %s50
      %p59 = scmp.eq.s32.totalorder %s18, 0
      %p60 = por %p58, %p59
      %p61 = scmp.ne.s32.totalorder %s49, %s50
      %p62 = scmp.eq.s32.totalorder %s19, 1
      %p63 = por %p61, %p62
      %p65 = scmp.ne.s32.totalorder %s50, %s64
      %p66 = scmp.eq.s32.totalorder %s19, 0
      %p67 = por %p65, %p66
      %s69 = sadd.s32 %s68, 1
      %p72 = scmp.eq.s32.totalorder %s13, 1
      %p73 = scmp.ne.s32.totalorder %s68, %s70
      %p74 = scmp.eq.s32.totalorder %s13, 0
      %p75 = por %p73, %p74
      %p76 = scmp.ne.s32.totalorder %s68, %s70
      %p77 = scmp.eq.s32.totalorder %s18, 1
      %p78 = por %p76, %p77
      %p79 = scmp.ne.s32.totalorder %s70, %s71
      %p80 = scmp.eq.s32.totalorder %s18, 0
      %p81 = por %p79, %p80
      %p82 = scmp.ne.s32.totalorder %s70, %s71
      %p83 = scmp.eq.s32.totalorder %s19, 1
      %p84 = por %p82, %p83
      %p86 = scmp.ne.s32.totalorder %s71, %s85
      %p87 = scmp.eq.s32.totalorder %s19, 0
      %p88 = por %p86, %p87
      %s90 = sadd.s32 %s89, 1
      %p93 = scmp.eq.s32.totalorder %s13, 1
      %p94 = scmp.ne.s32.totalorder %s89, %s91
      %p95 = scmp.eq.s32.totalorder %s13, 0
      %p96 = por %p94, %p95
      %p97 = scmp.ne.s32.totalorder %s89, %s91
      %p98 = scmp.eq.s32.totalorder %s18, 1
      %p99 = por %p97, %p98
      %p100 = scmp.ne.s32.totalorder %s91, %s92
      %p101 = scmp.eq.s32.totalorder %s18, 0
      %p102 = por %p100, %p101
      %p103 = scmp.ne.s32.totalorder %s91, %s92
      %p104 = scmp.eq.s32.totalorder %s19, 1
      %p105 = por %p103, %p104
      %p107 = scmp.ne.s32.totalorder %s92, %s106
      %p108 = scmp.eq.s32.totalorder %s19, 0
      %p109 = por %p107, %p108
      %s111 = sadd.s32 %s110, 1
      %p114 = scmp.eq.s32.totalorder %s13, 1
      %p115 = scmp.ne.s32.totalorder %s110, %s112
      %p116 = scmp.eq.s32.totalorder %s13, 0
      %p117 = por %p115, %p116
      %p118 = scmp.ne.s32.totalorder %s110, %s112
      %p119 = scmp.eq.s32.totalorder %s18, 1
      %p120 = por %p118, %p119
      %p121 = scmp.ne.s32.totalorder %s112, %s113
      %p122 = scmp.eq.s32.totalorder %s18, 0
      %p123 = por %p121, %p122
      %p124 = scmp.ne.s32.totalorder %s112, %s113
      %p125 = scmp.eq.s32.totalorder %s19, 1
      %p126 = por %p124, %p125
      %p128 = scmp.ne.s32.totalorder %s113, %s127
      %p129 = scmp.eq.s32.totalorder %s19, 0
      %p130 = por %p128, %p129
      %s132 = sadd.s32 %s131, 1
      %p135 = scmp.eq.s32.totalorder %s13, 1
      %p136 = scmp.ne.s32.totalorder %s131, %s133
      %p137 = scmp.eq.s32.totalorder %s13, 0
      %p138 = por %p136, %p137
      %p139 = scmp.ne.s32.totalorder %s131, %s133
      %p140 = scmp.eq.s32.totalorder %s18, 1
      %p141 = por %p139, %p140
      %p142 = scmp.ne.s32.totalorder %s133, %s134
      %p143 = scmp.eq.s32.totalorder %s18, 0
      %p144 = por %p142, %p143
      %p145 = scmp.ne.s32.totalorder %s133, %s134
      %p146 = scmp.eq.s32.totalorder %s19, 1
      %p147 = por %p145, %p146
      %p149 = scmp.ne.s32.totalorder %s134, %s148
      %p150 = scmp.eq.s32.totalorder %s19, 0
      %p151 = por %p149, %p150
      %s152 = ssub.s32 %s13, %s20
      %p153 = scmp.eq.s32.totalorder %s152, 0
      %s155 = sadd.s32 %s154, 1
      %s156 = scalar_select %p153, %s154, %s155
      %p159 = pneg %p153
      %p160 = scmp.eq.s32.totalorder %s13, 1
      %p161 = por %p159, %p160
      %p162 = scmp.ne.s32.totalorder %s154, %s157
      %p163 = scmp.eq.s32.totalorder %s13, 0
      %p164 = por %p162, %p163
      %p165 = scmp.ne.s32.totalorder %s154, %s157
      %p166 = scmp.eq.s32.totalorder %s18, 1
      %p167 = por %p165, %p166
      %p168 = scmp.ne.s32.totalorder %s157, %s158
      %p169 = scmp.eq.s32.totalorder %s18, 0
      %p170 = por %p168, %p169
      %p171 = scmp.ne.s32.totalorder %s157, %s158
      %p172 = scmp.eq.s32.totalorder %s19, 1
      %p173 = por %p171, %p172
      %p175 = scmp.ne.s32.totalorder %s158, %s174
      %p176 = scmp.eq.s32.totalorder %s19, 0
      %p177 = por %p175, %p176
      %s178 = ssub.s32 %s13, %s20
      %p179 = scmp.eq.s32.totalorder %s178, 0
      %s181 = sadd.s32 %s180, 1
      %s182 = scalar_select %p179, %s180, %s181
      %p185 = pneg %p179
      %p186 = scmp.eq.s32.totalorder %s13, 1
      %p187 = por %p185, %p186
      %p188 = scmp.ne.s32.totalorder %s180, %s183
      %p189 = scmp.eq.s32.totalorder %s13, 0
      %p190 = por %p188, %p189
      %p191 = scmp.ne.s32.totalorder %s180, %s183
      %p192 = scmp.eq.s32.totalorder %s18, 1
      %p193 = por %p191, %p192
      %p194 = scmp.ne.s32.totalorder %s183, %s184
      %p195 = scmp.eq.s32.totalorder %s18, 0
      %p196 = por %p194, %p195
      %p197 = scmp.ne.s32.totalorder %s183, %s184
      %p198 = scmp.eq.s32.totalorder %s19, 1
      %p199 = por %p197, %p198
      %p201 = scmp.ne.s32.totalorder %s184, %s200
      %p202 = scmp.eq.s32.totalorder %s19, 0
      %p203 = por %p201, %p202
      %p204 = scmp.le.s32.totalorder 1, %s13
      %p205 = scmp.lt.s32.totalorder %s13, 3
      %p206 = pnand %p204, %p205
      %p207 = pneg %p206
      // Predicated region
      $region9: #{tpu_custom_call.1} parent=5 // pred_check
        _
      $region10: #{tpu_custom_call.1} parent=5 // pred_check_branch
        %209 = sbr.rel (%p206) target = $region12
      $region11: #{tpu_custom_call.1} parent=5 // pred_region
        %s210 = ssub.s32 %s13, 1
        // Predicated region
        $region13: #{tpu_custom_call.1} parent=11 // pred_check
          %p211 = pneg %p60
        $region14: #{tpu_custom_call.1} parent=11 // pred_check_branch
          %213 = sbr.rel (%p211) target = $region16
        $region15: #{tpu_custom_call.1} parent=11 // pred_region
          _
        $region16: #{tpu_custom_call.1} parent=11 // pred_fallthru
          _
        // Predicated region
        $region17: #{tpu_custom_call.1} parent=11 // pred_check
          %p214 = pneg %p81
        $region18: #{tpu_custom_call.1} parent=11 // pred_check_branch
          %216 = sbr.rel (%p214) target = $region20
        $region19: #{tpu_custom_call.1} parent=11 // pred_region
          _
        $region20: #{tpu_custom_call.1} parent=11 // pred_fallthru
          _
        // Predicated region
        $region21: #{tpu_custom_call.1} parent=11 // pred_check
          %p217 = pneg %p102
        $region22: #{tpu_custom_call.1} parent=11 // pred_check_branch
          %219 = sbr.rel (%p217) target = $region24
        $region23: #{tpu_custom_call.1} parent=11 // pred_region
          _
        $region24: #{tpu_custom_call.1} parent=11 // pred_fallthru
          _
        // Predicated region
        $region25: #{tpu_custom_call.1} parent=11 // pred_check
          %p220 = pneg %p123
        $region26: #{tpu_custom_call.1} parent=11 // pred_check_branch
          %222 = sbr.rel (%p220) target = $region28
        $region27: #{tpu_custom_call.1} parent=11 // pred_region
          _
        $region28: #{tpu_custom_call.1} parent=11 // pred_fallthru
          _
        // Predicated region
        $region29: #{tpu_custom_call.1} parent=11 // pred_check
          %p223 = pneg %p144
        $region30: #{tpu_custom_call.1} parent=11 // pred_check_branch
          %225 = sbr.rel (%p223) target = $region32
        $region31: #{tpu_custom_call.1} parent=11 // pred_region
          _
        $region32: #{tpu_custom_call.1} parent=11 // pred_fallthru
          _
      $region12: #{tpu_custom_call.1} parent=5 // pred_fallthru
        _
      %p226 = scmp.lt.s32.totalorder %s13, 2
      // Predicated region
      $region33: #{tpu_custom_call.1} parent=5 // pred_check
        %p227 = pneg %p226
      $region34: #{tpu_custom_call.1} parent=5 // pred_check_branch
        %229 = sbr.rel (%p227) target = $region36
      $region35: #{tpu_custom_call.1} parent=5 // pred_region
        // Predicated region
        $region37: #{tpu_custom_call.1} parent=35 // pred_check
          %p230 = pneg %p33
        $region38: #{tpu_custom_call.1} parent=35 // pred_check_branch
          %232 = sbr.rel (%p230) target = $region40
        $region39: #{tpu_custom_call.1} parent=35 // pred_region
          %p233 = scmp.lt.s32.totalorder %s13, 1
          %s234 = scalar_select %p233, %s13, 1
          %s235 = smul.addr %s234, 8
          %s236 = scalar_lea.vmem %s0, %s235
        $region40: #{tpu_custom_call.1} parent=35 // pred_fallthru
          _
        // Predicated region
        $region41: #{tpu_custom_call.1} parent=35 // pred_check
          %p237 = pneg %p164
        $region42: #{tpu_custom_call.1} parent=35 // pred_check_branch
          %239 = sbr.rel (%p237) target = $region44
        $region43: #{tpu_custom_call.1} parent=35 // pred_region
          %p240 = scmp.lt.s32.totalorder %s13, 1
          %s241 = scalar_select %p240, %s13, 1
          %s242 = smul.addr %s241, 2
          %s243 = scalar_lea.vmem %s6, %s242
        $region44: #{tpu_custom_call.1} parent=35 // pred_fallthru
          _
      $region36: #{tpu_custom_call.1} parent=5 // pred_fallthru
        _
      %p244 = scmp.le.s32.totalorder 1, %s13
      %p245 = scmp.lt.s32.totalorder %s13, 3
      %p246 = pnand %p244, %p245
      %p247 = pneg %p246
      // Predicated region
      $region45: #{tpu_custom_call.1} parent=5 // pred_check
        _
      $region46: #{tpu_custom_call.1} parent=5 // pred_check_branch
        %249 = sbr.rel (%p246) target = $region48
      $region47: #{tpu_custom_call.1} parent=5 // pred_region
        %s250 = ssub.s32 %s13, 1
        %p251 = scmp.lt.s32.totalorder %s18, 1
        %s252 = scalar_select %p251, %s18, 1
        %s253 = smul.addr %s252, 8
        %s254 = scalar_lea.vmem %s0, %s253
        %p255 = pneg %p39
        %p256 = pneg %p36
        %p257 = pneg %p60
        %p258 = pneg %p57
        %p259 = pneg %p81
        %p260 = pneg %p78
        %p261 = pneg %p102
        %p262 = pneg %p99
        %p263 = pneg %p123
        %p264 = pneg %p120
        %p265 = pneg %p144
        %p266 = pneg %p141
        %p267 = scmp.lt.s32.totalorder %s18, 1
        %s268 = scalar_select %p267, %s18, 1
        %s269 = smul.addr %s268, 2
        %s270 = scalar_lea.vmem %s6, %s269
        %p271 = pneg %p170
        %p272 = pneg %p167
        %p273 = pneg %p196
        %p274 = pneg %p193
        %s275 = sand.u32 %s183, 1
        %s276 = sand.u32 %s183, 1
        %s277 = smul.addr %s276, 64
        %s278 = scalar_lea.vmem [#allocation2], %s277
        %p279 = scmp.lt.s32.totalorder %s18, 1
        %s280 = scalar_select %p279, %s18, 1
        %s281 = smul.addr %s280, 8
        %s282 = scalar_lea.vmem %s0, %s281
        %p283 = scmp.lt.s32.totalorder %s18, 1
        %s284 = scalar_select %p283, %s18, 1
        %s285 = smul.addr %s284, 2
        %s286 = scalar_lea.vmem %s6, %s285
        %v288 = vld [vmem:[%s2] sm:$0xff]
        %v289 = vld [vmem:[%s2 + $0x8] sm:$0xff]
        %v290 = vld [vmem:[%s2 + $0x10] sm:$0xff]
        %v291 = vld [vmem:[%s2 + $0x18] sm:$0xff]
        %v292 = vld [vmem:[%s2 + $0x20] sm:$0xff]
        %v293 = vld [vmem:[%s2 + $0x28] sm:$0xff]
        %v294 = vld [vmem:[%s2 + $0x30] sm:$0xff]
        %v295 = vld [vmem:[%s2 + $0x38] sm:$0xff]
        %v296 = vld [vmem:[%s2 + $0x40] sm:$0xff]
        %v297 = vld [vmem:[%s2 + $0x48] sm:$0xff]
        %v298 = vld [vmem:[%s2 + $0x50] sm:$0xff]
        %v299 = vld [vmem:[%s2 + $0x58] sm:$0xff]
        %v300 = vld [vmem:[%s2 + $0x60] sm:$0xff]
        %v301 = vld [vmem:[%s2 + $0x68] sm:$0xff]
        %v302 = vld [vmem:[%s2 + $0x70] sm:$0xff]
        %v303 = vld [vmem:[%s2 + $0x78] sm:$0xff]
        %v304 = vpack.c.bf16 %v289, %v288
        %v305 = vpack.c.bf16 %v291, %v290
        %v306 = vpack.c.bf16 %v293, %v292
        %v307 = vpack.c.bf16 %v295, %v294
        %v308 = vpack.c.bf16 %v297, %v296
        %v309 = vpack.c.bf16 %v299, %v298
        %v310 = vpack.c.bf16 %v301, %v300
        %v311 = vpack.c.bf16 %v303, %v302
        %v312 = vld [vmem:[%s1] sm:$0xff]
        %v313 = vld [vmem:[%s1 + $0x8] sm:$0xff]
        %v314 = vpack.c.bf16 %v313, %v312
        %v315 = vld [vmem:[%s282] sm:$0xff]
        %v316 = vpack.c.bf16 %v315, %v315
        %vm317 = vcmask 130048
        %v319 = vsel %vm317, %v314, 0
        %321 = vmatprep.subr.bf16.mxu0 0
        %322 = vmatpush1.bf16.msra.mxu0 %v304
        %323 = vmatprep.subr.bf16.mxu0 0
        %324 = vmatpush1.bf16.msra.mxu0 0
        %325 = vmatprep.subr.bf16.mxu0 0
        %326 = vmatpush1.bf16.msra.mxu0 0
        %327 = vmatprep.subr.bf16.mxu0 0
        %328 = vmatpush1.bf16.msra.mxu0 0
        %329 = vmatprep.subr.bf16.mxu0 0
        %330 = vmatpush1.bf16.msra.mxu0 0
        %331 = vmatprep.subr.bf16.mxu0 0
        %332 = vmatpush1.bf16.msra.mxu0 0
        %333 = vmatprep.subr.bf16.mxu0 0
        %334 = vmatpush1.bf16.msra.mxu0 0
        %335 = vmatprep.subr.bf16.mxu0 0
        %336 = vmatpush1.bf16.msra.mxu0 0
        %337 = vmatprep.subr.bf16.mxu0 0
        %338 = vmatpush1.bf16.msra.mxu0 0
        %339 = vmatprep.subr.bf16.mxu0 0
        %340 = vmatpush1.bf16.msra.mxu0 0
        %341 = vmatprep.subr.bf16.mxu0 0
        %342 = vmatpush1.bf16.msra.mxu0 0
        %343 = vmatprep.subr.bf16.mxu0 0
        %344 = vmatpush1.bf16.msra.mxu0 0
        %345 = vmatprep.subr.bf16.mxu0 0
        %346 = vmatpush1.bf16.msra.mxu0 0
        %347 = vmatprep.subr.bf16.mxu0 0
        %348 = vmatpush1.bf16.msra.mxu0 0
        %349 = vmatprep.subr.bf16.mxu0 0
        %350 = vmatpush1.bf16.msra.mxu0 0
        %351 = vmatprep.subr.bf16.mxu0 0
        %352 = vmatpush1.bf16.msra.mxu0 0
        %353 = vmatprep.mubr.bf16.mxu0 0
        %354 = vmatmul.mubr.bf16.gmra.mrb[0].mxu0 %v319
        %v355 = vpop.f32.mrb[0].mxu0
        %v356 = vadd.f32 0.0, %v355
        %v357 = vpop.f32.mrb[0].mxu0
        %v358 = vpop.f32.mrb[0].mxu0
        %v359 = vadd.f32 0.0, %v358
        %v360 = vpop.f32.mrb[0].mxu0
        %361 = vdwg.mxu0
        %362 = vmatprep.subr.bf16.mxu0 0
        %363 = vmatpush1.bf16.msra.mxu0 %v305
        %364 = vmatprep.subr.bf16.mxu0 0
        %365 = vmatpush1.bf16.msra.mxu0 0
        %366 = vmatprep.subr.bf16.mxu0 0
        %367 = vmatpush1.bf16.msra.mxu0 0
        %368 = vmatprep.subr.bf16.mxu0 0
        %369 = vmatpush1.bf16.msra.mxu0 0
        %370 = vmatprep.subr.bf16.mxu0 0
        %371 = vmatpush1.bf16.msra.mxu0 0
        %372 = vmatprep.subr.bf16.mxu0 0
        %373 = vmatpush1.bf16.msra.mxu0 0
        %374 = vmatprep.subr.bf16.mxu0 0
        %375 = vmatpush1.bf16.msra.mxu0 0
        %376 = vmatprep.subr.bf16.mxu0 0
        %377 = vmatpush1.bf16.msra.mxu0 0
        %378 = vmatprep.subr.bf16.mxu0 0
        %379 = vmatpush1.bf16.msra.mxu0 0
        %380 = vmatprep.subr.bf16.mxu0 0
        %381 = vmatpush1.bf16.msra.mxu0 0
        %382 = vmatprep.subr.bf16.mxu0 0
        %383 = vmatpush1.bf16.msra.mxu0 0
        %384 = vmatprep.subr.bf16.mxu0 0
        %385 = vmatpush1.bf16.msra.mxu0 0
        %386 = vmatprep.subr.bf16.mxu0 0
        %387 = vmatpush1.bf16.msra.mxu0 0
        %388 = vmatprep.subr.bf16.mxu0 0
        %389 = vmatpush1.bf16.msra.mxu0 0
        %390 = vmatprep.subr.bf16.mxu0 0
        %391 = vmatpush1.bf16.msra.mxu0 0
        %392 = vmatprep.subr.bf16.mxu0 0
        %393 = vmatpush1.bf16.msra.mxu0 0
        %394 = vmatprep.mubr.bf16.mxu0 0
        %395 = vmatmul.mubr.bf16.gmra.mrb[0].mxu0 %v319
        %v396 = vpop.f32.mrb[0].mxu0
        %v397 = vadd.f32 0.0, %v396
        %v398 = vpop.f32.mrb[0].mxu0
        %v399 = vpop.f32.mrb[0].mxu0
        %v400 = vadd.f32 0.0, %v399
        %v401 = vpop.f32.mrb[0].mxu0
        %402 = vdwg.mxu0
        %403 = vmatprep.subr.bf16.mxu0 0
        %404 = vmatpush1.bf16.msra.mxu0 %v306
        %405 = vmatprep.subr.bf16.mxu0 0
        %406 = vmatpush1.bf16.msra.mxu0 0
        %407 = vmatprep.subr.bf16.mxu0 0
        %408 = vmatpush1.bf16.msra.mxu0 0
        %409 = vmatprep.subr.bf16.mxu0 0
        %410 = vmatpush1.bf16.msra.mxu0 0
        %411 = vmatprep.subr.bf16.mxu0 0
        %412 = vmatpush1.bf16.msra.mxu0 0
        %413 = vmatprep.subr.bf16.mxu0 0
        %414 = vmatpush1.bf16.msra.mxu0 0
        %415 = vmatprep.subr.bf16.mxu0 0
        %416 = vmatpush1.bf16.msra.mxu0 0
        %417 = vmatprep.subr.bf16.mxu0 0
        %418 = vmatpush1.bf16.msra.mxu0 0
        %419 = vmatprep.subr.bf16.mxu0 0
        %420 = vmatpush1.bf16.msra.mxu0 0
        %421 = vmatprep.subr.bf16.mxu0 0
        %422 = vmatpush1.bf16.msra.mxu0 0
        %423 = vmatprep.subr.bf16.mxu0 0
        %424 = vmatpush1.bf16.msra.mxu0 0
        %425 = vmatprep.subr.bf16.mxu0 0
        %426 = vmatpush1.bf16.msra.mxu0 0
        %427 = vmatprep.subr.bf16.mxu0 0
        %428 = vmatpush1.bf16.msra.mxu0 0
        %429 = vmatprep.subr.bf16.mxu0 0
        %430 = vmatpush1.bf16.msra.mxu0 0
        %431 = vmatprep.subr.bf16.mxu0 0
        %432 = vmatpush1.bf16.msra.mxu0 0
        %433 = vmatprep.subr.bf16.mxu0 0
        %434 = vmatpush1.bf16.msra.mxu0 0
        %435 = vmatprep.mubr.bf16.mxu0 0
        %436 = vmatmul.mubr.bf16.gmra.mrb[0].mxu0 %v319
        %v437 = vpop.f32.mrb[0].mxu0
        %v438 = vadd.f32 0.0, %v437
        %v439 = vpop.f32.mrb[0].mxu0
        %v440 = vpop.f32.mrb[0].mxu0
        %v441 = vadd.f32 0.0, %v440
        %v442 = vpop.f32.mrb[0].mxu0
        %443 = vdwg.mxu0
        %444 = vmatprep.subr.bf16.mxu0 0
        %445 = vmatpush1.bf16.msra.mxu0 %v307
        %446 = vmatprep.subr.bf16.mxu0 0
        %447 = vmatpush1.bf16.msra.mxu0 0
        %448 = vmatprep.subr.bf16.mxu0 0
        %449 = vmatpush1.bf16.msra.mxu0 0
        %450 = vmatprep.subr.bf16.mxu0 0
        %451 = vmatpush1.bf16.msra.mxu0 0
        %452 = vmatprep.subr.bf16.mxu0 0
        %453 = vmatpush1.bf16.msra.mxu0 0
        %454 = vmatprep.subr.bf16.mxu0 0
        %455 = vmatpush1.bf16.msra.mxu0 0
        %456 = vmatprep.subr.bf16.mxu0 0
        %457 = vmatpush1.bf16.msra.mxu0 0
        %458 = vmatprep.subr.bf16.mxu0 0
        %459 = vmatpush1.bf16.msra.mxu0 0
        %460 = vmatprep.subr.bf16.mxu0 0
        %461 = vmatpush1.bf16.msra.mxu0 0
        %462 = vmatprep.subr.bf16.mxu0 0
        %463 = vmatpush1.bf16.msra.mxu0 0
        %464 = vmatprep.subr.bf16.mxu0 0
        %465 = vmatpush1.bf16.msra.mxu0 0
        %466 = vmatprep.subr.bf16.mxu0 0
        %467 = vmatpush1.bf16.msra.mxu0 0
        %468 = vmatprep.subr.bf16.mxu0 0
        %469 = vmatpush1.bf16.msra.mxu0 0
        %470 = vmatprep.subr.bf16.mxu0 0
        %471 = vmatpush1.bf16.msra.mxu0 0
        %472 = vmatprep.subr.bf16.mxu0 0
        %473 = vmatpush1.bf16.msra.mxu0 0
        %474 = vmatprep.subr.bf16.mxu0 0
        %475 = vmatpush1.bf16.msra.mxu0 0
        %476 = vmatprep.mubr.bf16.mxu0 0
        %477 = vmatmul.mubr.bf16.gmra.mrb[0].mxu0 %v319
        %v478 = vpop.f32.mrb[0].mxu0
        %v479 = vadd.f32 0.0, %v478
        %v480 = vpop.f32.mrb[0].mxu0
        %v481 = vpop.f32.mrb[0].mxu0
        %v482 = vadd.f32 0.0, %v481
        %v483 = vpop.f32.mrb[0].mxu0
        %484 = vdwg.mxu0
        %485 = vmatprep.subr.bf16.mxu0 0
        %486 = vmatpush1.bf16.msra.mxu0 %v308
        %487 = vmatprep.subr.bf16.mxu0 0
        %488 = vmatpush1.bf16.msra.mxu0 0
        %489 = vmatprep.subr.bf16.mxu0 0
        %490 = vmatpush1.bf16.msra.mxu0 0
        %491 = vmatprep.subr.bf16.mxu0 0
        %492 = vmatpush1.bf16.msra.mxu0 0
        %493 = vmatprep.subr.bf16.mxu0 0
        %494 = vmatpush1.bf16.msra.mxu0 0
        %495 = vmatprep.subr.bf16.mxu0 0
        %496 = vmatpush1.bf16.msra.mxu0 0
        %497 = vmatprep.subr.bf16.mxu0 0
        %498 = vmatpush1.bf16.msra.mxu0 0
        %499 = vmatprep.subr.bf16.mxu0 0
        %500 = vmatpush1.bf16.msra.mxu0 0
        %501 = vmatprep.subr.bf16.mxu0 0
        %502 = vmatpush1.bf16.msra.mxu0 0
        %503 = vmatprep.subr.bf16.mxu0 0
        %504 = vmatpush1.bf16.msra.mxu0 0
        %505 = vmatprep.subr.bf16.mxu0 0
        %506 = vmatpush1.bf16.msra.mxu0 0
        %507 = vmatprep.subr.bf16.mxu0 0
        %508 = vmatpush1.bf16.msra.mxu0 0
        %509 = vmatprep.subr.bf16.mxu0 0
        %510 = vmatpush1.bf16.msra.mxu0 0
        %511 = vmatprep.subr.bf16.mxu0 0
        %512 = vmatpush1.bf16.msra.mxu0 0
        %513 = vmatprep.subr.bf16.mxu0 0
        %514 = vmatpush1.bf16.msra.mxu0 0
        %515 = vmatprep.subr.bf16.mxu0 0
        %516 = vmatpush1.bf16.msra.mxu0 0
        %517 = vmatprep.mubr.bf16.mxu0 0
        %518 = vmatmul.mubr.bf16.gmra.mrb[0].mxu0 %v319
        %v519 = vpop.f32.mrb[0].mxu0
        %v520 = vadd.f32 0.0, %v519
        %v521 = vpop.f32.mrb[0].mxu0
        %v522 = vpop.f32.mrb[0].mxu0
        %v523 = vadd.f32 0.0, %v522
        %v524 = vpop.f32.mrb[0].mxu0
        %525 = vdwg.mxu0
        %526 = vmatprep.subr.bf16.mxu0 0
        %527 = vmatpush1.bf16.msra.mxu0 %v309
        %528 = vmatprep.subr.bf16.mxu0 0
        %529 = vmatpush1.bf16.msra.mxu0 0
        %530 = vmatprep.subr.bf16.mxu0 0
        %531 = vmatpush1.bf16.msra.mxu0 0
        %532 = vmatprep.subr.bf16.mxu0 0
        %533 = vmatpush1.bf16.msra.mxu0 0
        %534 = vmatprep.subr.bf16.mxu0 0
        %535 = vmatpush1.bf16.msra.mxu0 0
        %536 = vmatprep.subr.bf16.mxu0 0
        %537 = vmatpush1.bf16.msra.mxu0 0
        %538 = vmatprep.subr.bf16.mxu0 0
        %539 = vmatpush1.bf16.msra.mxu0 0
        %540 = vmatprep.subr.bf16.mxu0 0
        %541 = vmatpush1.bf16.msra.mxu0 0
        %542 = vmatprep.subr.bf16.mxu0 0
        %543 = vmatpush1.bf16.msra.mxu0 0
        %544 = vmatprep.subr.bf16.mxu0 0
        %545 = vmatpush1.bf16.msra.mxu0 0
        %546 = vmatprep.subr.bf16.mxu0 0
        %547 = vmatpush1.bf16.msra.mxu0 0
        %548 = vmatprep.subr.bf16.mxu0 0
        %549 = vmatpush1.bf16.msra.mxu0 0
        %550 = vmatprep.subr.bf16.mxu0 0
        %551 = vmatpush1.bf16.msra.mxu0 0
        %552 = vmatprep.subr.bf16.mxu0 0
        %553 = vmatpush1.bf16.msra.mxu0 0
        %554 = vmatprep.subr.bf16.mxu0 0
        %555 = vmatpush1.bf16.msra.mxu0 0
        %556 = vmatprep.subr.bf16.mxu0 0
        %557 = vmatpush1.bf16.msra.mxu0 0
        %558 = vmatprep.mubr.bf16.mxu0 0
        %559 = vmatmul.mubr.bf16.gmra.mrb[0].mxu0 %v319
        %v560 = vpop.f32.mrb[0].mxu0
        %v561 = vadd.f32 0.0, %v560
        %v562 = vpop.f32.mrb[0].mxu0
        %v563 = vpop.f32.mrb[0].mxu0
        %v564 = vadd.f32 0.0, %v563
        %v565 = vpop.f32.mrb[0].mxu0
        %566 = vdwg.mxu0
        %567 = vmatprep.subr.bf16.mxu0 0
        %568 = vmatpush1.bf16.msra.mxu0 %v310
        %569 = vmatprep.subr.bf16.mxu0 0
        %570 = vmatpush1.bf16.msra.mxu0 0
        %571 = vmatprep.subr.bf16.mxu0 0
        %572 = vmatpush1.bf16.msra.mxu0 0
        %573 = vmatprep.subr.bf16.mxu0 0
        %574 = vmatpush1.bf16.msra.mxu0 0
        %575 = vmatprep.subr.bf16.mxu0 0
        %576 = vmatpush1.bf16.msra.mxu0 0
        %577 = vmatprep.subr.bf16.mxu0 0
        %578 = vmatpush1.bf16.msra.mxu0 0
        %579 = vmatprep.subr.bf16.mxu0 0
        %580 = vmatpush1.bf16.msra.mxu0 0
        %581 = vmatprep.subr.bf16.mxu0 0
        %582 = vmatpush1.bf16.msra.mxu0 0
        %583 = vmatprep.subr.bf16.mxu0 0
        %584 = vmatpush1.bf16.msra.mxu0 0
        %585 = vmatprep.subr.bf16.mxu0 0
        %586 = vmatpush1.bf16.msra.mxu0 0
        %587 = vmatprep.subr.bf16.mxu0 0
        %588 = vmatpush1.bf16.msra.mxu0 0
        %589 = vmatprep.subr.bf16.mxu0 0
        %590 = vmatpush1.bf16.msra.mxu0 0
        %591 = vmatprep.subr.bf16.mxu0 0
        %592 = vmatpush1.bf16.msra.mxu0 0
        %593 = vmatprep.subr.bf16.mxu0 0
        %594 = vmatpush1.bf16.msra.mxu0 0
        %595 = vmatprep.subr.bf16.mxu0 0
        %596 = vmatpush1.bf16.msra.mxu0 0
        %597 = vmatprep.subr.bf16.mxu0 0
        %598 = vmatpush1.bf16.msra.mxu0 0
        %599 = vmatprep.mubr.bf16.mxu0 0
        %600 = vmatmul.mubr.bf16.gmra.mrb[0].mxu0 %v319
        %v601 = vpop.f32.mrb[0].mxu0
        %v602 = vadd.f32 0.0, %v601
        %v603 = vpop.f32.mrb[0].mxu0
        %v604 = vpop.f32.mrb[0].mxu0
        %v605 = vadd.f32 0.0, %v604
        %v606 = vpop.f32.mrb[0].mxu0
        %607 = vdwg.mxu0
        %608 = vmatprep.subr.bf16.mxu0 0
        %609 = vmatpush1.bf16.msra.mxu0 %v311
        %610 = vmatprep.subr.bf16.mxu0 0
        %611 = vmatpush1.bf16.msra.mxu0 0
        %612 = vmatprep.subr.bf16.mxu0 0
        %613 = vmatpush1.bf16.msra.mxu0 0
        %614 = vmatprep.subr.bf16.mxu0 0
        %615 = vmatpush1.bf16.msra.mxu0 0
        %616 = vmatprep.subr.bf16.mxu0 0
        %617 = vmatpush1.bf16.msra.mxu0 0
        %618 = vmatprep.subr.bf16.mxu0 0
        %619 = vmatpush1.bf16.msra.mxu0 0
        %620 = vmatprep.subr.bf16.mxu0 0
        %621 = vmatpush1.bf16.msra.mxu0 0
        %622 = vmatprep.subr.bf16.mxu0 0
        %623 = vmatpush1.bf16.msra.mxu0 0
        %624 = vmatprep.subr.bf16.mxu0 0
        %625 = vmatpush1.bf16.msra.mxu0 0
        %626 = vmatprep.subr.bf16.mxu0 0
        %627 = vmatpush1.bf16.msra.mxu0 0
        %628 = vmatprep.subr.bf16.mxu0 0
        %629 = vmatpush1.bf16.msra.mxu0 0
        %630 = vmatprep.subr.bf16.mxu0 0
        %631 = vmatpush1.bf16.msra.mxu0 0
        %632 = vmatprep.subr.bf16.mxu0 0
        %633 = vmatpush1.bf16.msra.mxu0 0
        %634 = vmatprep.subr.bf16.mxu0 0
        %635 = vmatpush1.bf16.msra.mxu0 0
        %636 = vmatprep.subr.bf16.mxu0 0
        %637 = vmatpush1.bf16.msra.mxu0 0
        %638 = vmatprep.subr.bf16.mxu0 0
        %639 = vmatpush1.bf16.msra.mxu0 0
        %640 = vmatprep.mubr.bf16.mxu0 0
        %641 = vmatmul.mubr.bf16.gmra.mrb[0].mxu0 %v319
        %v642 = vpop.f32.mrb[0].mxu0
        %v643 = vadd.f32 0.0, %v642
        %v644 = vpop.f32.mrb[0].mxu0
        %v645 = vpop.f32.mrb[0].mxu0
        %v646 = vadd.f32 0.0, %v645
        %v647 = vpop.f32.mrb[0].mxu0
        %648 = vdwg.mxu0
        %v650 = vsel %vm317, %v316, 0
        %652 = vmatprep.subr.bf16.mxu0 0
        %653 = vmatpush1.bf16.msra.mxu0 %v304
        %654 = vmatprep.subr.bf16.mxu0 0
        %655 = vmatpush1.bf16.msra.mxu0 0
        %656 = vmatprep.subr.bf16.mxu0 0
        %657 = vmatpush1.bf16.msra.mxu0 0
        %658 = vmatprep.subr.bf16.mxu0 0
        %659 = vmatpush1.bf16.msra.mxu0 0
        %660 = vmatprep.subr.bf16.mxu0 0
        %661 = vmatpush1.bf16.msra.mxu0 0
        %662 = vmatprep.subr.bf16.mxu0 0
        %663 = vmatpush1.bf16.msra.mxu0 0
        %664 = vmatprep.subr.bf16.mxu0 0
        %665 = vmatpush1.bf16.msra.mxu0 0
        %666 = vmatprep.subr.bf16.mxu0 0
        %667 = vmatpush1.bf16.msra.mxu0 0
        %668 = vmatprep.subr.bf16.mxu0 0
        %669 = vmatpush1.bf16.msra.mxu0 0
        %670 = vmatprep.subr.bf16.mxu0 0
        %671 = vmatpush1.bf16.msra.mxu0 0
        %672 = vmatprep.subr.bf16.mxu0 0
        %673 = vmatpush1.bf16.msra.mxu0 0
        %674 = vmatprep.subr.bf16.mxu0 0
        %675 = vmatpush1.bf16.msra.mxu0 0
        %676 = vmatprep.subr.bf16.mxu0 0
        %677 = vmatpush1.bf16.msra.mxu0 0
        %678 = vmatprep.subr.bf16.mxu0 0
        %679 = vmatpush1.bf16.msra.mxu0 0
        %680 = vmatprep.subr.bf16.mxu0 0
        %681 = vmatpush1.bf16.msra.mxu0 0
        %682 = vmatprep.subr.bf16.mxu0 0
        %683 = vmatpush1.bf16.msra.mxu0 0
        %684 = vmatprep.mubr.bf16.mxu0 0
        %685 = vmatmul.mubr.bf16.gmra.mrb[0].mxu0 %v650
        %v686 = vpop.f32.mrb[0].mxu0
        %v687 = vadd.f32 0.0, %v686
        %v688 = vpop.f32.mrb[0].mxu0
        %v689 = vpop.f32.mrb[0].mxu0
        %v690 = vpop.f32.mrb[0].mxu0
        %691 = vdwg.mxu0
        %692 = vmatprep.subr.bf16.mxu0 0
        %693 = vmatpush1.bf16.msra.mxu0 %v305
        %694 = vmatprep.subr.bf16.mxu0 0
        %695 = vmatpush1.bf16.msra.mxu0 0
        %696 = vmatprep.subr.bf16.mxu0 0
        %697 = vmatpush1.bf16.msra.mxu0 0
        %698 = vmatprep.subr.bf16.mxu0 0
        %699 = vmatpush1.bf16.msra.mxu0 0
        %700 = vmatprep.subr.bf16.mxu0 0
        %701 = vmatpush1.bf16.msra.mxu0 0
        %702 = vmatprep.subr.bf16.mxu0 0
        %703 = vmatpush1.bf16.msra.mxu0 0
        %704 = vmatprep.subr.bf16.mxu0 0
        %705 = vmatpush1.bf16.msra.mxu0 0
        %706 = vmatprep.subr.bf16.mxu0 0
        %707 = vmatpush1.bf16.msra.mxu0 0
        %708 = vmatprep.subr.bf16.mxu0 0
        %709 = vmatpush1.bf16.msra.mxu0 0
        %710 = vmatprep.subr.bf16.mxu0 0
        %711 = vmatpush1.bf16.msra.mxu0 0
        %712 = vmatprep.subr.bf16.mxu0 0
        %713 = vmatpush1.bf16.msra.mxu0 0
        %714 = vmatprep.subr.bf16.mxu0 0
        %715 = vmatpush1.bf16.msra.mxu0 0
        %716 = vmatprep.subr.bf16.mxu0 0
        %717 = vmatpush1.bf16.msra.mxu0 0
        %718 = vmatprep.subr.bf16.mxu0 0
        %719 = vmatpush1.bf16.msra.mxu0 0
        %720 = vmatprep.subr.bf16.mxu0 0
        %721 = vmatpush1.bf16.msra.mxu0 0
        %722 = vmatprep.subr.bf16.mxu0 0
        %723 = vmatpush1.bf16.msra.mxu0 0
        %724 = vmatprep.mubr.bf16.mxu0 0
        %725 = vmatmul.mubr.bf16.gmra.mrb[0].mxu0 %v650
        %v726 = vpop.f32.mrb[0].mxu0
        %v727 = vadd.f32 0.0, %v726
        %v728 = vpop.f32.mrb[0].mxu0
        %v729 = vpop.f32.mrb[0].mxu0
        %v730 = vpop.f32.mrb[0].mxu0
        %731 = vdwg.mxu0
        %732 = vmatprep.subr.bf16.mxu0 0
        %733 = vmatpush1.bf16.msra.mxu0 %v306
        %734 = vmatprep.subr.bf16.mxu0 0
        %735 = vmatpush1.bf16.msra.mxu0 0
        %736 = vmatprep.subr.bf16.mxu0 0
        %737 = vmatpush1.bf16.msra.mxu0 0
        %738 = vmatprep.subr.bf16.mxu0 0
        %739 = vmatpush1.bf16.msra.mxu0 0
        %740 = vmatprep.subr.bf16.mxu0 0
        %741 = vmatpush1.bf16.msra.mxu0 0
        %742 = vmatprep.subr.bf16.mxu0 0
        %743 = vmatpush1.bf16.msra.mxu0 0
        %744 = vmatprep.subr.bf16.mxu0 0
        %745 = vmatpush1.bf16.msra.mxu0 0
        %746 = vmatprep.subr.bf16.mxu0 0
        %747 = vmatpush1.bf16.msra.mxu0 0
        %748 = vmatprep.subr.bf16.mxu0 0
        %749 = vmatpush1.bf16.msra.mxu0 0
        %750 = vmatprep.subr.bf16.mxu0 0
        %751 = vmatpush1.bf16.msra.mxu0 0
        %752 = vmatprep.subr.bf16.mxu0 0
        %753 = vmatpush1.bf16.msra.mxu0 0
        %754 = vmatprep.subr.bf16.mxu0 0
        %755 = vmatpush1.bf16.msra.mxu0 0
        %756 = vmatprep.subr.bf16.mxu0 0
        %757 = vmatpush1.bf16.msra.mxu0 0
        %758 = vmatprep.subr.bf16.mxu0 0
        %759 = vmatpush1.bf16.msra.mxu0 0
        %760 = vmatprep.subr.bf16.mxu0 0
        %761 = vmatpush1.bf16.msra.mxu0 0
        %762 = vmatprep.subr.bf16.mxu0 0
        %763 = vmatpush1.bf16.msra.mxu0 0
        %764 = vmatprep.mubr.bf16.mxu0 0
        %765 = vmatmul.mubr.bf16.gmra.mrb[0].mxu0 %v650
        %v766 = vpop.f32.mrb[0].mxu0
        %v767 = vadd.f32 0.0, %v766
        %v768 = vpop.f32.mrb[0].mxu0
        %v769 = vpop.f32.mrb[0].mxu0
        %v770 = vpop.f32.mrb[0].mxu0
        %771 = vdwg.mxu0
        %772 = vmatprep.subr.bf16.mxu0 0
        %773 = vmatpush1.bf16.msra.mxu0 %v307
        %774 = vmatprep.subr.bf16.mxu0 0
        %775 = vmatpush1.bf16.msra.mxu0 0
        %776 = vmatprep.subr.bf16.mxu0 0
        %777 = vmatpush1.bf16.msra.mxu0 0
        %778 = vmatprep.subr.bf16.mxu0 0
        %779 = vmatpush1.bf16.msra.mxu0 0
        %780 = vmatprep.subr.bf16.mxu0 0
        %781 = vmatpush1.bf16.msra.mxu0 0
        %782 = vmatprep.subr.bf16.mxu0 0
        %783 = vmatpush1.bf16.msra.mxu0 0
        %784 = vmatprep.subr.bf16.mxu0 0
        %785 = vmatpush1.bf16.msra.mxu0 0
        %786 = vmatprep.subr.bf16.mxu0 0
        %787 = vmatpush1.bf16.msra.mxu0 0
        %788 = vmatprep.subr.bf16.mxu0 0
        %789 = vmatpush1.bf16.msra.mxu0 0
        %790 = vmatprep.subr.bf16.mxu0 0
        %791 = vmatpush1.bf16.msra.mxu0 0
        %792 = vmatprep.subr.bf16.mxu0 0
        %793 = vmatpush1.bf16.msra.mxu0 0
        %794 = vmatprep.subr.bf16.mxu0 0
        %795 = vmatpush1.bf16.msra.mxu0 0
        %796 = vmatprep.subr.bf16.mxu0 0
        %797 = vmatpush1.bf16.msra.mxu0 0
        %798 = vmatprep.subr.bf16.mxu0 0
        %799 = vmatpush1.bf16.msra.mxu0 0
        %800 = vmatprep.subr.bf16.mxu0 0
        %801 = vmatpush1.bf16.msra.mxu0 0
        %802 = vmatprep.subr.bf16.mxu0 0
        %803 = vmatpush1.bf16.msra.mxu0 0
        %804 = vmatprep.mubr.bf16.mxu0 0
        %805 = vmatmul.mubr.bf16.gmra.mrb[0].mxu0 %v650
        %v806 = vpop.f32.mrb[0].mxu0
        %v807 = vadd.f32 0.0, %v806
        %v808 = vpop.f32.mrb[0].mxu0
        %v809 = vpop.f32.mrb[0].mxu0
        %v810 = vpop.f32.mrb[0].mxu0
        %811 = vdwg.mxu0
        %812 = vmatprep.subr.bf16.mxu0 0
        %813 = vmatpush1.bf16.msra.mxu0 %v308
        %814 = vmatprep.subr.bf16.mxu0 0
        %815 = vmatpush1.bf16.msra.mxu0 0
        %816 = vmatprep.subr.bf16.mxu0 0
        %817 = vmatpush1.bf16.msra.mxu0 0
        %818 = vmatprep.subr.bf16.mxu0 0
        %819 = vmatpush1.bf16.msra.mxu0 0
        %820 = vmatprep.subr.bf16.mxu0 0
        %821 = vmatpush1.bf16.msra.mxu0 0
        %822 = vmatprep.subr.bf16.mxu0 0
        %823 = vmatpush1.bf16.msra.mxu0 0
        %824 = vmatprep.subr.bf16.mxu0 0
        %825 = vmatpush1.bf16.msra.mxu0 0
        %826 = vmatprep.subr.bf16.mxu0 0
        %827 = vmatpush1.bf16.msra.mxu0 0
        %828 = vmatprep.subr.bf16.mxu0 0
        %829 = vmatpush1.bf16.msra.mxu0 0
        %830 = vmatprep.subr.bf16.mxu0 0
        %831 = vmatpush1.bf16.msra.mxu0 0
        %832 = vmatprep.subr.bf16.mxu0 0
        %833 = vmatpush1.bf16.msra.mxu0 0
        %834 = vmatprep.subr.bf16.mxu0 0
        %835 = vmatpush1.bf16.msra.mxu0 0
        %836 = vmatprep.subr.bf16.mxu0 0
        %837 = vmatpush1.bf16.msra.mxu0 0
        %838 = vmatprep.subr.bf16.mxu0 0
        %839 = vmatpush1.bf16.msra.mxu0 0
        %840 = vmatprep.subr.bf16.mxu0 0
        %841 = vmatpush1.bf16.msra.mxu0 0
        %842 = vmatprep.subr.bf16.mxu0 0
        %843 = vmatpush1.bf16.msra.mxu0 0
        %844 = vmatprep.mubr.bf16.mxu0 0
        %845 = vmatmul.mubr.bf16.gmra.mrb[0].mxu0 %v650
        %v846 = vpop.f32.mrb[0].mxu0
        %v847 = vadd.f32 0.0, %v846
        %v848 = vpop.f32.mrb[0].mxu0
        %v849 = vpop.f32.mrb[0].mxu0
        %v850 = vpop.f32.mrb[0].mxu0
        %851 = vdwg.mxu0
        %852 = vmatprep.subr.bf16.mxu0 0
        %853 = vmatpush1.bf16.msra.mxu0 %v309
        %854 = vmatprep.subr.bf16.mxu0 0
        %855 = vmatpush1.bf16.msra.mxu0 0
        %856 = vmatprep.subr.bf16.mxu0 0
        %857 = vmatpush1.bf16.msra.mxu0 0
        %858 = vmatprep.subr.bf16.mxu0 0
        %859 = vmatpush1.bf16.msra.mxu0 0
        %860 = vmatprep.subr.bf16.mxu0 0
        %861 = vmatpush1.bf16.msra.mxu0 0
        %862 = vmatprep.subr.bf16.mxu0 0
        %863 = vmatpush1.bf16.msra.mxu0 0
        %864 = vmatprep.subr.bf16.mxu0 0
        %865 = vmatpush1.bf16.msra.mxu0 0
        %866 = vmatprep.subr.bf16.mxu0 0
        %867 = vmatpush1.bf16.msra.mxu0 0
        %868 = vmatprep.subr.bf16.mxu0 0
        %869 = vmatpush1.bf16.msra.mxu0 0
        %870 = vmatprep.subr.bf16.mxu0 0
        %871 = vmatpush1.bf16.msra.mxu0 0
        %872 = vmatprep.subr.bf16.mxu0 0
        %873 = vmatpush1.bf16.msra.mxu0 0
        %874 = vmatprep.subr.bf16.mxu0 0
        %875 = vmatpush1.bf16.msra.mxu0 0
        %876 = vmatprep.subr.bf16.mxu0 0
        %877 = vmatpush1.bf16.msra.mxu0 0
        %878 = vmatprep.subr.bf16.mxu0 0
        %879 = vmatpush1.bf16.msra.mxu0 0
        %880 = vmatprep.subr.bf16.mxu0 0
        %881 = vmatpush1.bf16.msra.mxu0 0
        %882 = vmatprep.subr.bf16.mxu0 0
        %883 = vmatpush1.bf16.msra.mxu0 0
        %884 = vmatprep.mubr.bf16.mxu0 0
        %885 = vmatmul.mubr.bf16.gmra.mrb[0].mxu0 %v650
        %v886 = vpop.f32.mrb[0].mxu0
        %v887 = vadd.f32 0.0, %v886
        %v888 = vpop.f32.mrb[0].mxu0
        %v889 = vpop.f32.mrb[0].mxu0
        %v890 = vpop.f32.mrb[0].mxu0
        %891 = vdwg.mxu0
        %892 = vmatprep.subr.bf16.mxu0 0
        %893 = vmatpush1.bf16.msra.mxu0 %v310
        %894 = vmatprep.subr.bf16.mxu0 0
        %895 = vmatpush1.bf16.msra.mxu0 0
        %896 = vmatprep.subr.bf16.mxu0 0
        %897 = vmatpush1.bf16.msra.mxu0 0
        %898 = vmatprep.subr.bf16.mxu0 0
        %899 = vmatpush1.bf16.msra.mxu0 0
        %900 = vmatprep.subr.bf16.mxu0 0
        %901 = vmatpush1.bf16.msra.mxu0 0
        %902 = vmatprep.subr.bf16.mxu0 0
        %903 = vmatpush1.bf16.msra.mxu0 0
        %904 = vmatprep.subr.bf16.mxu0 0
        %905 = vmatpush1.bf16.msra.mxu0 0
        %906 = vmatprep.subr.bf16.mxu0 0
        %907 = vmatpush1.bf16.msra.mxu0 0
        %908 = vmatprep.subr.bf16.mxu0 0
        %909 = vmatpush1.bf16.msra.mxu0 0
        %910 = vmatprep.subr.bf16.mxu0 0
        %911 = vmatpush1.bf16.msra.mxu0 0
        %912 = vmatprep.subr.bf16.mxu0 0
        %913 = vmatpush1.bf16.msra.mxu0 0
        %914 = vmatprep.subr.bf16.mxu0 0
        %915 = vmatpush1.bf16.msra.mxu0 0
        %916 = vmatprep.subr.bf16.mxu0 0
        %917 = vmatpush1.bf16.msra.mxu0 0
        %918 = vmatprep.subr.bf16.mxu0 0
        %919 = vmatpush1.bf16.msra.mxu0 0
        %920 = vmatprep.subr.bf16.mxu0 0
        %921 = vmatpush1.bf16.msra.mxu0 0
        %922 = vmatprep.subr.bf16.mxu0 0
        %923 = vmatpush1.bf16.msra.mxu0 0
        %924 = vmatprep.mubr.bf16.mxu0 0
        %925 = vmatmul.mubr.bf16.gmra.mrb[0].mxu0 %v650
        %v926 = vpop.f32.mrb[0].mxu0
        %v927 = vadd.f32 0.0, %v926
        %v928 = vpop.f32.mrb[0].mxu0
        %v929 = vpop.f32.mrb[0].mxu0
        %v930 = vpop.f32.mrb[0].mxu0
        %931 = vdwg.mxu0
        %932 = vmatprep.subr.bf16.mxu0 0
        %933 = vmatpush1.bf16.msra.mxu0 %v311
        %934 = vmatprep.subr.bf16.mxu0 0
        %935 = vmatpush1.bf16.msra.mxu0 0
        %936 = vmatprep.subr.bf16.mxu0 0
        %937 = vmatpush1.bf16.msra.mxu0 0
        %938 = vmatprep.subr.bf16.mxu0 0
        %939 = vmatpush1.bf16.msra.mxu0 0
        %940 = vmatprep.subr.bf16.mxu0 0
        %941 = vmatpush1.bf16.msra.mxu0 0
        %942 = vmatprep.subr.bf16.mxu0 0
        %943 = vmatpush1.bf16.msra.mxu0 0
        %944 = vmatprep.subr.bf16.mxu0 0
        %945 = vmatpush1.bf16.msra.mxu0 0
        %946 = vmatprep.subr.bf16.mxu0 0
        %947 = vmatpush1.bf16.msra.mxu0 0
        %948 = vmatprep.subr.bf16.mxu0 0
        %949 = vmatpush1.bf16.msra.mxu0 0
        %950 = vmatprep.subr.bf16.mxu0 0
        %951 = vmatpush1.bf16.msra.mxu0 0
        %952 = vmatprep.subr.bf16.mxu0 0
        %953 = vmatpush1.bf16.msra.mxu0 0
        %954 = vmatprep.subr.bf16.mxu0 0
        %955 = vmatpush1.bf16.msra.mxu0 0
        %956 = vmatprep.subr.bf16.mxu0 0
        %957 = vmatpush1.bf16.msra.mxu0 0
        %958 = vmatprep.subr.bf16.mxu0 0
        %959 = vmatpush1.bf16.msra.mxu0 0
        %960 = vmatprep.subr.bf16.mxu0 0
        %961 = vmatpush1.bf16.msra.mxu0 0
        %962 = vmatprep.subr.bf16.mxu0 0
        %963 = vmatpush1.bf16.msra.mxu0 0
        %964 = vmatprep.mubr.bf16.mxu0 0
        %965 = vmatmul.mubr.bf16.gmra.mrb[0].mxu0 %v650
        %v966 = vpop.f32.mrb[0].mxu0
        %v967 = vadd.f32 0.0, %v966
        %v968 = vpop.f32.mrb[0].mxu0
        %v969 = vpop.f32.mrb[0].mxu0
        %v970 = vpop.f32.mrb[0].mxu0
        %971 = vdwg.mxu0
        %v972 = vld [vmem:[%s3] sm:$0xff]
        %v974 = vcombine.high %v972, %v972
        %v976 = vunpack.c.l.s4 1966171168
        %v977 = vunpack.c.0.s8 %v976
        %v978 = vlaneseq
        %v979 = vshrl.u32 %v978, 7
        %v980 = vsub.s32 %v977, %v979
        %v981 = vrot.slane %v972, %v980
        %v983 = vunpack.c.l.s4 1966171168
        %v984 = vunpack.c.0.s8 %v983
        %v985 = vlaneseq
        %v986 = vshrl.u32 %v985, 7
        %v987 = vsub.s32 %v984, %v986
        %v988 = vrot.slane %v974, %v987
        %v989 = vcombine.high %v981, %v981
        %v990 = vcombine.high %v988, %v988
        %v992 = vunpack.c.l.s4 1966171168
        %v993 = vunpack.c.0.s8 %v992
        %v994 = vlaneseq
        %v995 = vshrl.u32 %v994, 7
        %v996 = vsub.s32 %v993, %v995
        %v997 = vrot.slane %v981, %v996
        %v999 = vunpack.c.l.s4 1966171168
        %v1000 = vunpack.c.0.s8 %v999
        %v1001 = vlaneseq
        %v1002 = vshrl.u32 %v1001, 7
        %v1003 = vsub.s32 %v1000, %v1002
        %v1004 = vrot.slane %v988, %v1003
        %v1006 = vunpack.c.l.s4 1966171168
        %v1007 = vunpack.c.0.s8 %v1006
        %v1008 = vlaneseq
        %v1009 = vshrl.u32 %v1008, 7
        %v1010 = vsub.s32 %v1007, %v1009
        %v1011 = vrot.slane %v989, %v1010
        %v1013 = vunpack.c.l.s4 1966171168
        %v1014 = vunpack.c.0.s8 %v1013
        %v1015 = vlaneseq
        %v1016 = vshrl.u32 %v1015, 7
        %v1017 = vsub.s32 %v1014, %v1016
        %v1018 = vrot.slane %v990, %v1017
        %v1019 = vcombine.high %v997, %v997
        %v1020 = vcombine.high %v1004, %v1004
        %v1021 = vcombine.high %v1011, %v1011
        %v1022 = vcombine.high %v1018, %v1018
        %v1023 = vlaneseq
        %v1024 = vshrl.u32 %v1023, 7
        %v1025 = vsub.s32 0, %v1024
        %v1026 = vrot.slane %v997, %v1025
        %v1027 = vlaneseq
        %v1028 = vshrl.u32 %v1027, 7
        %v1029 = vsub.s32 0, %v1028
        %v1030 = vrot.slane %v1011, %v1029
        %v1031 = vlaneseq
        %v1032 = vshrl.u32 %v1031, 7
        %v1033 = vsub.s32 0, %v1032
        %v1034 = vrot.slane %v1019, %v1033
        %v1035 = vlaneseq
        %v1036 = vshrl.u32 %v1035, 7
        %v1037 = vsub.s32 0, %v1036
        %v1038 = vrot.slane %v1021, %v1037
        %v1039 = vlaneseq
        %v1040 = vshrl.u32 %v1039, 7
        %v1041 = vsub.s32 0, %v1040
        %v1042 = vrot.slane %v1004, %v1041
        %v1043 = vlaneseq
        %v1044 = vshrl.u32 %v1043, 7
        %v1045 = vsub.s32 0, %v1044
        %v1046 = vrot.slane %v1018, %v1045
        %v1047 = vlaneseq
        %v1048 = vshrl.u32 %v1047, 7
        %v1049 = vsub.s32 0, %v1048
        %v1050 = vrot.slane %v1020, %v1049
        %v1051 = vlaneseq
        %v1052 = vshrl.u32 %v1051, 7
        %v1053 = vsub.s32 0, %v1052
        %v1054 = vrot.slane %v1022, %v1053
        %v1063 = vmul.f32 %v356, %v1026
        %v1064 = vmul.f32 %v359, %v1026
        %v1065 = vmul.f32 %v397, %v1030
        %v1066 = vmul.f32 %v400, %v1030
        %v1067 = vmul.f32 %v438, %v1034
        %v1068 = vmul.f32 %v441, %v1034
        %v1069 = vmul.f32 %v479, %v1038
        %v1070 = vmul.f32 %v482, %v1038
        %v1071 = vmul.f32 %v520, %v1042
        %v1072 = vmul.f32 %v523, %v1042
        %v1073 = vmul.f32 %v561, %v1046
        %v1074 = vmul.f32 %v564, %v1046
        %v1075 = vmul.f32 %v602, %v1050
        %v1076 = vmul.f32 %v605, %v1050
        %v1077 = vmul.f32 %v643, %v1054
        %v1078 = vmul.f32 %v646, %v1054
        %vm1079 = vcmask 64512
        %v1080 = vsel %vm1079, %v1063, 0.0
        %1081 = vadd.xlane.f32.xlu0 %v1080
        %v1082 = vpop.xlane.xlu0 %1081
        %v1083 = vsel %vm1079, %v1064, 0.0
        %1084 = vadd.xlane.f32.xlu0 %v1083
        %v1085 = vpop.xlane.xlu0 %1084
        %v1086 = vsel %vm1079, %v1065, 0.0
        %1087 = vadd.xlane.f32.xlu0 %v1086
        %v1088 = vpop.xlane.xlu0 %1087
        %v1089 = vsel %vm1079, %v1066, 0.0
        %1090 = vadd.xlane.f32.xlu0 %v1089
        %v1091 = vpop.xlane.xlu0 %1090
        %v1092 = vsel %vm1079, %v1067, 0.0
        %1093 = vadd.xlane.f32.xlu0 %v1092
        %v1094 = vpop.xlane.xlu0 %1093
        %v1095 = vsel %vm1079, %v1068, 0.0
        %1096 = vadd.xlane.f32.xlu0 %v1095
        %v1097 = vpop.xlane.xlu0 %1096
        %v1098 = vsel %vm1079, %v1069, 0.0
        %1099 = vadd.xlane.f32.xlu0 %v1098
        %v1100 = vpop.xlane.xlu0 %1099
        %v1101 = vsel %vm1079, %v1070, 0.0
        %1102 = vadd.xlane.f32.xlu0 %v1101
        %v1103 = vpop.xlane.xlu0 %1102
        %v1104 = vsel %vm1079, %v1071, 0.0
        %1105 = vadd.xlane.f32.xlu0 %v1104
        %v1106 = vpop.xlane.xlu0 %1105
        %v1107 = vsel %vm1079, %v1072, 0.0
        %1108 = vadd.xlane.f32.xlu0 %v1107
        %v1109 = vpop.xlane.xlu0 %1108
        %v1110 = vsel %vm1079, %v1073, 0.0
        %1111 = vadd.xlane.f32.xlu0 %v1110
        %v1112 = vpop.xlane.xlu0 %1111
        %v1113 = vsel %vm1079, %v1074, 0.0
        %1114 = vadd.xlane.f32.xlu0 %v1113
        %v1115 = vpop.xlane.xlu0 %1114
        %v1116 = vsel %vm1079, %v1075, 0.0
        %1117 = vadd.xlane.f32.xlu0 %v1116
        %v1118 = vpop.xlane.xlu0 %1117
        %v1119 = vsel %vm1079, %v1076, 0.0
        %1120 = vadd.xlane.f32.xlu0 %v1119
        %v1121 = vpop.xlane.xlu0 %1120
        %v1122 = vsel %vm1079, %v1077, 0.0
        %1123 = vadd.xlane.f32.xlu0 %v1122
        %v1124 = vpop.xlane.xlu0 %1123
        %v1125 = vsel %vm1079, %v1078, 0.0
        %1126 = vadd.xlane.f32.xlu0 %v1125
        %v1127 = vpop.xlane.xlu0 %1126
        %v1128 = vld [vmem:[%s4] sm:$0xff]
        %v1130 = vcombine.high %v1128, %v1128
        %v1132 = vunpack.c.l.s4 1966171168
        %v1133 = vunpack.c.0.s8 %v1132
        %v1134 = vlaneseq
        %v1135 = vshrl.u32 %v1134, 7
        %v1136 = vsub.s32 %v1133, %v1135
        %v1137 = vrot.slane %v1128, %v1136
        %v1139 = vunpack.c.l.s4 1966171168
        %v1140 = vunpack.c.0.s8 %v1139
        %v1141 = vlaneseq
        %v1142 = vshrl.u32 %v1141, 7
        %v1143 = vsub.s32 %v1140, %v1142
        %v1144 = vrot.slane %v1130, %v1143
        %v1145 = vcombine.high %v1137, %v1137
        %v1146 = vcombine.high %v1144, %v1144
        %v1148 = vunpack.c.l.s4 1966171168
        %v1149 = vunpack.c.0.s8 %v1148
        %v1150 = vlaneseq
        %v1151 = vshrl.u32 %v1150, 7
        %v1152 = vsub.s32 %v1149, %v1151
        %v1153 = vrot.slane %v1137, %v1152
        %v1155 = vunpack.c.l.s4 1966171168
        %v1156 = vunpack.c.0.s8 %v1155
        %v1157 = vlaneseq
        %v1158 = vshrl.u32 %v1157, 7
        %v1159 = vsub.s32 %v1156, %v1158
        %v1160 = vrot.slane %v1144, %v1159
        %v1162 = vunpack.c.l.s4 1966171168
        %v1163 = vunpack.c.0.s8 %v1162
        %v1164 = vlaneseq
        %v1165 = vshrl.u32 %v1164, 7
        %v1166 = vsub.s32 %v1163, %v1165
        %v1167 = vrot.slane %v1145, %v1166
        %v1169 = vunpack.c.l.s4 1966171168
        %v1170 = vunpack.c.0.s8 %v1169
        %v1171 = vlaneseq
        %v1172 = vshrl.u32 %v1171, 7
        %v1173 = vsub.s32 %v1170, %v1172
        %v1174 = vrot.slane %v1146, %v1173
        %v1175 = vcombine.high %v1153, %v1153
        %v1176 = vcombine.high %v1160, %v1160
        %v1177 = vcombine.high %v1167, %v1167
        %v1178 = vcombine.high %v1174, %v1174
        %v1179 = vlaneseq
        %v1180 = vshrl.u32 %v1179, 7
        %v1181 = vsub.s32 0, %v1180
        %v1182 = vrot.slane %v1153, %v1181
        %v1183 = vlaneseq
        %v1184 = vshrl.u32 %v1183, 7
        %v1185 = vsub.s32 0, %v1184
        %v1186 = vrot.slane %v1167, %v1185
        %v1187 = vlaneseq
        %v1188 = vshrl.u32 %v1187, 7
        %v1189 = vsub.s32 0, %v1188
        %v1190 = vrot.slane %v1175, %v1189
        %v1191 = vlaneseq
        %v1192 = vshrl.u32 %v1191, 7
        %v1193 = vsub.s32 0, %v1192
        %v1194 = vrot.slane %v1177, %v1193
        %v1195 = vlaneseq
        %v1196 = vshrl.u32 %v1195, 7
        %v1197 = vsub.s32 0, %v1196
        %v1198 = vrot.slane %v1160, %v1197
        %v1199 = vlaneseq
        %v1200 = vshrl.u32 %v1199, 7
        %v1201 = vsub.s32 0, %v1200
        %v1202 = vrot.slane %v1174, %v1201
        %v1203 = vlaneseq
        %v1204 = vshrl.u32 %v1203, 7
        %v1205 = vsub.s32 0, %v1204
        %v1206 = vrot.slane %v1176, %v1205
        %v1207 = vlaneseq
        %v1208 = vshrl.u32 %v1207, 7
        %v1209 = vsub.s32 0, %v1208
        %v1210 = vrot.slane %v1178, %v1209
        %v1219 = vmul.f32 %v687, %v1182
        %v1220 = vmul.f32 %v727, %v1186
        %v1221 = vmul.f32 %v767, %v1190
        %v1222 = vmul.f32 %v807, %v1194
        %v1223 = vmul.f32 %v847, %v1198
        %v1224 = vmul.f32 %v887, %v1202
        %v1225 = vmul.f32 %v927, %v1206
        %v1226 = vmul.f32 %v967, %v1210
        %v1227 = vsel %vm1079, %v1219, 0.0
        %1228 = vadd.xlane.f32.xlu0 %v1227
        %v1229 = vpop.xlane.xlu0 %1228
        %v1230 = vsel %vm1079, %v1220, 0.0
        %1231 = vadd.xlane.f32.xlu0 %v1230
        %v1232 = vpop.xlane.xlu0 %1231
        %v1233 = vsel %vm1079, %v1221, 0.0
        %1234 = vadd.xlane.f32.xlu0 %v1233
        %v1235 = vpop.xlane.xlu0 %1234
        %v1236 = vsel %vm1079, %v1222, 0.0
        %1237 = vadd.xlane.f32.xlu0 %v1236
        %v1238 = vpop.xlane.xlu0 %1237
        %v1239 = vsel %vm1079, %v1223, 0.0
        %1240 = vadd.xlane.f32.xlu0 %v1239
        %v1241 = vpop.xlane.xlu0 %1240
        %v1242 = vsel %vm1079, %v1224, 0.0
        %1243 = vadd.xlane.f32.xlu0 %v1242
        %v1244 = vpop.xlane.xlu0 %1243
        %v1245 = vsel %vm1079, %v1225, 0.0
        %1246 = vadd.xlane.f32.xlu0 %v1245
        %v1247 = vpop.xlane.xlu0 %1246
        %v1248 = vsel %vm1079, %v1226, 0.0
        %1249 = vadd.xlane.f32.xlu0 %v1248
        %v1250 = vpop.xlane.xlu0 %1249
        %v1267 = vlaneseq
        %v1268 = vand.u32 %v1267, 127
        %v1269 = vlaneseq
        %v1270 = vshrl.u32 %v1269, 7
        %v1271 = vsub.s32 %v1268, %v1270
        %v1272 = vrot.slane %v1082, %v1271
        %v1273 = vadd.s32 %v1268, 4294967288
        %v1274 = vlaneseq
        %v1275 = vshrl.u32 %v1274, 7
        %v1276 = vsub.s32 %v1273, %v1275
        %v1277 = vrot.slane %v1085, %v1276
        %vm1278 = vcmask 130112
        %v1279 = vsel %vm1278, %v1277, %v1272
        %v1280 = vlaneseq
        %v1281 = vshrl.u32 %v1280, 7
        %v1282 = vsub.s32 %v1268, %v1281
        %v1283 = vrot.slane %v1088, %v1282
        %v1284 = vlaneseq
        %v1285 = vshrl.u32 %v1284, 7
        %v1286 = vsub.s32 %v1273, %v1285
        %v1287 = vrot.slane %v1091, %v1286
        %v1288 = vsel %vm1278, %v1287, %v1283
        %v1289 = vlaneseq
        %v1290 = vshrl.u32 %v1289, 7
        %v1291 = vsub.s32 %v1268, %v1290
        %v1292 = vrot.slane %v1094, %v1291
        %v1293 = vlaneseq
        %v1294 = vshrl.u32 %v1293, 7
        %v1295 = vsub.s32 %v1273, %v1294
        %v1296 = vrot.slane %v1097, %v1295
        %v1297 = vsel %vm1278, %v1296, %v1292
        %v1298 = vlaneseq
        %v1299 = vshrl.u32 %v1298, 7
        %v1300 = vsub.s32 %v1268, %v1299
        %v1301 = vrot.slane %v1100, %v1300
        %v1302 = vlaneseq
        %v1303 = vshrl.u32 %v1302, 7
        %v1304 = vsub.s32 %v1273, %v1303
        %v1305 = vrot.slane %v1103, %v1304
        %v1306 = vsel %vm1278, %v1305, %v1301
        %v1307 = vlaneseq
        %v1308 = vshrl.u32 %v1307, 7
        %v1309 = vsub.s32 %v1268, %v1308
        %v1310 = vrot.slane %v1106, %v1309
        %v1311 = vlaneseq
        %v1312 = vshrl.u32 %v1311, 7
        %v1313 = vsub.s32 %v1273, %v1312
        %v1314 = vrot.slane %v1109, %v1313
        %v1315 = vsel %vm1278, %v1314, %v1310
        %v1316 = vlaneseq
        %v1317 = vshrl.u32 %v1316, 7
        %v1318 = vsub.s32 %v1268, %v1317
        %v1319 = vrot.slane %v1112, %v1318
        %v1320 = vlaneseq
        %v1321 = vshrl.u32 %v1320, 7
        %v1322 = vsub.s32 %v1273, %v1321
        %v1323 = vrot.slane %v1115, %v1322
        %v1324 = vsel %vm1278, %v1323, %v1319
        %v1325 = vlaneseq
        %v1326 = vshrl.u32 %v1325, 7
        %v1327 = vsub.s32 %v1268, %v1326
        %v1328 = vrot.slane %v1118, %v1327
        %v1329 = vlaneseq
        %v1330 = vshrl.u32 %v1329, 7
        %v1331 = vsub.s32 %v1273, %v1330
        %v1332 = vrot.slane %v1121, %v1331
        %v1333 = vsel %vm1278, %v1332, %v1328
        %v1334 = vlaneseq
        %v1335 = vshrl.u32 %v1334, 7
        %v1336 = vsub.s32 %v1268, %v1335
        %v1337 = vrot.slane %v1124, %v1336
        %v1338 = vlaneseq
        %v1339 = vshrl.u32 %v1338, 7
        %v1340 = vsub.s32 %v1273, %v1339
        %v1341 = vrot.slane %v1127, %v1340
        %v1342 = vsel %vm1278, %v1341, %v1337
        %vm1343 = vcmask 1042434
        %v1344 = vsel %vm1343, %v1279, %v1279
        %vm1345 = vcmask 1043459
        %v1346 = vsel %vm1345, %v1279, %v1344
        %vm1347 = vcmask 1044484
        %v1348 = vsel %vm1347, %v1279, %v1346
        %vm1349 = vcmask 1045509
        %v1350 = vsel %vm1349, %v1279, %v1348
        %vm1351 = vcmask 1046534
        %v1352 = vsel %vm1351, %v1279, %v1350
        %vm1353 = vcmask 1047559
        %v1354 = vsel %vm1353, %v1279, %v1352
        %v1355 = vsel %vm1343, %v1288, %v1288
        %v1356 = vsel %vm1345, %v1288, %v1355
        %v1357 = vsel %vm1347, %v1288, %v1356
        %v1358 = vsel %vm1349, %v1288, %v1357
        %v1359 = vsel %vm1351, %v1288, %v1358
        %v1360 = vsel %vm1353, %v1288, %v1359
        %v1361 = vsel %vm1343, %v1297, %v1297
        %v1362 = vsel %vm1345, %v1297, %v1361
        %v1363 = vsel %vm1347, %v1297, %v1362
        %v1364 = vsel %vm1349, %v1297, %v1363
        %v1365 = vsel %vm1351, %v1297, %v1364
        %v1366 = vsel %vm1353, %v1297, %v1365
        %v1367 = vsel %vm1343, %v1306, %v1306
        %v1368 = vsel %vm1345, %v1306, %v1367
        %v1369 = vsel %vm1347, %v1306, %v1368
        %v1370 = vsel %vm1349, %v1306, %v1369
        %v1371 = vsel %vm1351, %v1306, %v1370
        %v1372 = vsel %vm1353, %v1306, %v1371
        %v1373 = vsel %vm1343, %v1315, %v1315
        %v1374 = vsel %vm1345, %v1315, %v1373
        %v1375 = vsel %vm1347, %v1315, %v1374
        %v1376 = vsel %vm1349, %v1315, %v1375
        %v1377 = vsel %vm1351, %v1315, %v1376
        %v1378 = vsel %vm1353, %v1315, %v1377
        %v1379 = vsel %vm1343, %v1324, %v1324
        %v1380 = vsel %vm1345, %v1324, %v1379
        %v1381 = vsel %vm1347, %v1324, %v1380
        %v1382 = vsel %vm1349, %v1324, %v1381
        %v1383 = vsel %vm1351, %v1324, %v1382
        %v1384 = vsel %vm1353, %v1324, %v1383
        %v1385 = vsel %vm1343, %v1333, %v1333
        %v1386 = vsel %vm1345, %v1333, %v1385
        %v1387 = vsel %vm1347, %v1333, %v1386
        %v1388 = vsel %vm1349, %v1333, %v1387
        %v1389 = vsel %vm1351, %v1333, %v1388
        %v1390 = vsel %vm1353, %v1333, %v1389
        %v1391 = vsel %vm1343, %v1342, %v1342
        %v1392 = vsel %vm1345, %v1342, %v1391
        %v1393 = vsel %vm1347, %v1342, %v1392
        %v1394 = vsel %vm1349, %v1342, %v1393
        %v1395 = vsel %vm1351, %v1342, %v1394
        %v1396 = vsel %vm1353, %v1342, %v1395
        %v1405 = vadd.f32 %v1229, %v1354
        %v1406 = vadd.f32 %v1232, %v1360
        %v1407 = vadd.f32 %v1235, %v1366
        %v1408 = vadd.f32 %v1238, %v1372
        %v1409 = vadd.f32 %v1241, %v1378
        %v1410 = vadd.f32 %v1244, %v1384
        %v1411 = vadd.f32 %v1247, %v1390
        %v1412 = vadd.f32 %v1250, %v1396
        %vm1413 = vcmp.gt.f32.partialorder %v1405, 0.0
        %vm1414 = vcmp.gt.f32.partialorder %v1406, 0.0
        %vm1415 = vcmp.gt.f32.partialorder %v1407, 0.0
        %vm1416 = vcmp.gt.f32.partialorder %v1408, 0.0
        %vm1417 = vcmp.gt.f32.partialorder %v1409, 0.0
        %vm1418 = vcmp.gt.f32.partialorder %v1410, 0.0
        %vm1419 = vcmp.gt.f32.partialorder %v1411, 0.0
        %vm1420 = vcmp.gt.f32.partialorder %v1412, 0.0
        %v1421 = vmul.f32 %v1405, 0.2
        %v1422 = vmul.f32 %v1406, 0.2
        %v1423 = vmul.f32 %v1407, 0.2
        %v1424 = vmul.f32 %v1408, 0.2
        %v1425 = vmul.f32 %v1409, 0.2
        %v1426 = vmul.f32 %v1410, 0.2
        %v1427 = vmul.f32 %v1411, 0.2
        %v1428 = vmul.f32 %v1412, 0.2
        %v1429 = vsel %vm1413, %v1405, %v1421
        %v1430 = vsel %vm1414, %v1406, %v1422
        %v1431 = vsel %vm1415, %v1407, %v1423
        %v1432 = vsel %vm1416, %v1408, %v1424
        %v1433 = vsel %vm1417, %v1409, %v1425
        %v1434 = vsel %vm1418, %v1410, %v1426
        %v1435 = vsel %vm1419, %v1411, %v1427
        %v1436 = vsel %vm1420, %v1412, %v1428
        %v1437 = vld [vmem:[%s286] sm:$0x3]
        %v1438 = vunpack.c.0.s8 %v1437
        %vm1439 = vcmp.ne.s32.totalorder %v1438, 0
        %v1440 = vsel %vm1439, 1, 0
        %vm1441 = vcmp.eq.s32.totalorder %v1440, 1
        %v1442 = vsel %vm1441, %v1429, -1e+30
        %v1443 = vsel %vm1441, %v1430, -1e+30
        %v1444 = vsel %vm1441, %v1431, -1e+30
        %v1445 = vsel %vm1441, %v1432, -1e+30
        %v1446 = vsel %vm1441, %v1433, -1e+30
        %v1447 = vsel %vm1441, %v1434, -1e+30
        %v1448 = vsel %vm1441, %v1435, -1e+30
        %v1449 = vsel %vm1441, %v1436, -1e+30
        %v1450 = vsel %vm317, %v1442, -inf
        %1451 = vmax.xlane.f32.xlu0 %v1450
        %v1452 = vpop.xlane.xlu0 %1451
        %v1453 = vsel %vm317, %v1443, -inf
        %1454 = vmax.xlane.f32.xlu0 %v1453
        %v1455 = vpop.xlane.xlu0 %1454
        %v1456 = vsel %vm317, %v1444, -inf
        %1457 = vmax.xlane.f32.xlu0 %v1456
        %v1458 = vpop.xlane.xlu0 %1457
        %v1459 = vsel %vm317, %v1445, -inf
        %1460 = vmax.xlane.f32.xlu0 %v1459
        %v1461 = vpop.xlane.xlu0 %1460
        %v1462 = vsel %vm317, %v1446, -inf
        %1463 = vmax.xlane.f32.xlu0 %v1462
        %v1464 = vpop.xlane.xlu0 %1463
        %v1465 = vsel %vm317, %v1447, -inf
        %1466 = vmax.xlane.f32.xlu0 %v1465
        %v1467 = vpop.xlane.xlu0 %1466
        %v1468 = vsel %vm317, %v1448, -inf
        %1469 = vmax.xlane.f32.xlu0 %v1468
        %v1470 = vpop.xlane.xlu0 %1469
        %v1471 = vsel %vm317, %v1449, -inf
        %1472 = vmax.xlane.f32.xlu0 %v1471
        %v1473 = vpop.xlane.xlu0 %1472
        %v1474 = vsub.f32 %v1442, %v1452
        %v1475 = vsub.f32 %v1443, %v1455
        %v1476 = vsub.f32 %v1444, %v1458
        %v1477 = vsub.f32 %v1445, %v1461
        %v1478 = vsub.f32 %v1446, %v1464
        %v1479 = vsub.f32 %v1447, %v1467
        %v1480 = vsub.f32 %v1448, %v1470
        %v1481 = vsub.f32 %v1449, %v1473
        %v1482 = vmul.f32 %v1474, 1.442695
        %v1483 = vpow.pop %v1482
        %v1484 = vmul.f32 %v1475, 1.442695
        %v1485 = vpow.pop %v1484
        %v1486 = vmul.f32 %v1476, 1.442695
        %v1487 = vpow.pop %v1486
        %v1488 = vmul.f32 %v1477, 1.442695
        %v1489 = vpow.pop %v1488
        %v1490 = vmul.f32 %v1478, 1.442695
        %v1491 = vpow.pop %v1490
        %v1492 = vmul.f32 %v1479, 1.442695
        %v1493 = vpow.pop %v1492
        %v1494 = vmul.f32 %v1480, 1.442695
        %v1495 = vpow.pop %v1494
        %v1496 = vmul.f32 %v1481, 1.442695
        %v1497 = vpow.pop %v1496
        %v1498 = vsel %vm317, %v1483, 0.0
        %1499 = vadd.xlane.f32.xlu0 %v1498
        %v1500 = vpop.xlane.xlu0 %1499
        %v1501 = vsel %vm317, %v1485, 0.0
        %1502 = vadd.xlane.f32.xlu0 %v1501
        %v1503 = vpop.xlane.xlu0 %1502
        %v1504 = vsel %vm317, %v1487, 0.0
        %1505 = vadd.xlane.f32.xlu0 %v1504
        %v1506 = vpop.xlane.xlu0 %1505
        %v1507 = vsel %vm317, %v1489, 0.0
        %1508 = vadd.xlane.f32.xlu0 %v1507
        %v1509 = vpop.xlane.xlu0 %1508
        %v1510 = vsel %vm317, %v1491, 0.0
        %1511 = vadd.xlane.f32.xlu0 %v1510
        %v1512 = vpop.xlane.xlu0 %1511
        %v1513 = vsel %vm317, %v1493, 0.0
        %1514 = vadd.xlane.f32.xlu0 %v1513
        %v1515 = vpop.xlane.xlu0 %1514
        %v1516 = vsel %vm317, %v1495, 0.0
        %1517 = vadd.xlane.f32.xlu0 %v1516
        %v1518 = vpop.xlane.xlu0 %1517
        %v1519 = vsel %vm317, %v1497, 0.0
        %1520 = vadd.xlane.f32.xlu0 %v1519
        %v1521 = vpop.xlane.xlu0 %1520
        %v1522 = vrcp.pop %v1500
        %v1523 = vrcp.pop %v1503
        %v1524 = vrcp.pop %v1506
        %v1525 = vrcp.pop %v1509
        %v1526 = vrcp.pop %v1512
        %v1527 = vrcp.pop %v1515
        %v1528 = vrcp.pop %v1518
        %v1529 = vrcp.pop %v1521
        %v1530 = vmul.f32 %v1483, %v1522
        %v1531 = vmul.f32 %v1485, %v1523
        %v1532 = vmul.f32 %v1487, %v1524
        %v1533 = vmul.f32 %v1489, %v1525
        %v1534 = vmul.f32 %v1491, %v1526
        %v1535 = vmul.f32 %v1493, %v1527
        %v1536 = vmul.f32 %v1495, %v1528
        %v1537 = vmul.f32 %v1497, %v1529
        %v1538 = vpack.c.bf16 %v1530, %v1530
        %v1539 = vpack.c.bf16 %v1531, %v1531
        %v1540 = vpack.c.bf16 %v1532, %v1532
        %v1541 = vpack.c.bf16 %v1533, %v1533
        %v1542 = vpack.c.bf16 %v1534, %v1534
        %v1543 = vpack.c.bf16 %v1535, %v1535
        %v1544 = vpack.c.bf16 %v1536, %v1536
        %v1545 = vpack.c.bf16 %v1537, %v1537
        %v1546 = vpack.c.bf16 %v359, %v356
        %v1547 = vpack.c.bf16 %v400, %v397
        %v1548 = vpack.c.bf16 %v441, %v438
        %v1549 = vpack.c.bf16 %v482, %v479
        %v1550 = vpack.c.bf16 %v523, %v520
        %v1551 = vpack.c.bf16 %v564, %v561
        %v1552 = vpack.c.bf16 %v605, %v602
        %v1553 = vpack.c.bf16 %v646, %v643
        %v1554 = vld [vmem:[%s5] sm:$0x1]
        %v1555 = vld [vmem:[%s5 + $0x1] sm:$0x1]
        %v1556 = vld [vmem:[%s5 + $0x2] sm:$0x1]
        %v1557 = vld [vmem:[%s5 + $0x3] sm:$0x1]
        %v1558 = vld [vmem:[%s5 + $0x4] sm:$0x1]
        %v1559 = vld [vmem:[%s5 + $0x5] sm:$0x1]
        %v1560 = vld [vmem:[%s5 + $0x6] sm:$0x1]
        %v1561 = vld [vmem:[%s5 + $0x7] sm:$0x1]
        %v1570 = vlaneseq
        %v1571 = vshrl.u32 %v1570, 7
        %v1572 = vsub.s32 0, %v1571
        %v1573 = vrot.slane %v1554, %v1572
        %v1574 = vlaneseq
        %v1575 = vshrl.u32 %v1574, 7
        %v1576 = vsub.s32 0, %v1575
        %v1577 = vrot.slane %v1555, %v1576
        %v1578 = vlaneseq
        %v1579 = vshrl.u32 %v1578, 7
        %v1580 = vsub.s32 0, %v1579
        %v1581 = vrot.slane %v1556, %v1580
        %v1582 = vlaneseq
        %v1583 = vshrl.u32 %v1582, 7
        %v1584 = vsub.s32 0, %v1583
        %v1585 = vrot.slane %v1557, %v1584
        %v1586 = vlaneseq
        %v1587 = vshrl.u32 %v1586, 7
        %v1588 = vsub.s32 0, %v1587
        %v1589 = vrot.slane %v1558, %v1588
        %v1590 = vlaneseq
        %v1591 = vshrl.u32 %v1590, 7
        %v1592 = vsub.s32 0, %v1591
        %v1593 = vrot.slane %v1559, %v1592
        %v1594 = vlaneseq
        %v1595 = vshrl.u32 %v1594, 7
        %v1596 = vsub.s32 0, %v1595
        %v1597 = vrot.slane %v1560, %v1596
        %v1598 = vlaneseq
        %v1599 = vshrl.u32 %v1598, 7
        %v1600 = vsub.s32 0, %v1599
        %v1601 = vrot.slane %v1561, %v1600
        %v1611 = vsel %vm317, %v1538, 0
        %1613 = vmatprep.subr.bf16.mxu0 0
        %1614 = vmatpush1.bf16.msra.mxu0 %v1546
        %1615 = vmatprep.subr.bf16.mxu0 0
        %1616 = vmatpush1.bf16.msra.mxu0 0
        %1617 = vmatprep.subr.bf16.mxu0 0
        %1618 = vmatpush1.bf16.msra.mxu0 0
        %1619 = vmatprep.subr.bf16.mxu0 0
        %1620 = vmatpush1.bf16.msra.mxu0 0
        %1621 = vmatprep.subr.bf16.mxu0 0
        %1622 = vmatpush1.bf16.msra.mxu0 0
        %1623 = vmatprep.subr.bf16.mxu0 0
        %1624 = vmatpush1.bf16.msra.mxu0 0
        %1625 = vmatprep.subr.bf16.mxu0 0
        %1626 = vmatpush1.bf16.msra.mxu0 0
        %1627 = vmatprep.subr.bf16.mxu0 0
        %1628 = vmatpush1.bf16.msra.mxu0 0
        %1629 = vmatprep.subr.bf16.mxu0 0
        %1630 = vmatpush1.bf16.msra.mxu0 0
        %1631 = vmatprep.subr.bf16.mxu0 0
        %1632 = vmatpush1.bf16.msra.mxu0 0
        %1633 = vmatprep.subr.bf16.mxu0 0
        %1634 = vmatpush1.bf16.msra.mxu0 0
        %1635 = vmatprep.subr.bf16.mxu0 0
        %1636 = vmatpush1.bf16.msra.mxu0 0
        %1637 = vmatprep.subr.bf16.mxu0 0
        %1638 = vmatpush1.bf16.msra.mxu0 0
        %1639 = vmatprep.subr.bf16.mxu0 0
        %1640 = vmatpush1.bf16.msra.mxu0 0
        %1641 = vmatprep.subr.bf16.mxu0 0
        %1642 = vmatpush1.bf16.msra.mxu0 0
        %1643 = vmatprep.subr.bf16.mxu0 0
        %1644 = vmatpush1.bf16.msra.mxu0 0
        %1645 = vmatprep.mubr.bf16.mxu0 0
        %1646 = vmatmul.mubr.bf16.gmra.mrb[0].mxu0 %v1611
        %v1647 = vpop.f32.mrb[0].mxu0
        %v1648 = vadd.f32 %v1573, %v1647
        %v1649 = vpop.f32.mrb[0].mxu0
        %v1650 = vpop.f32.mrb[0].mxu0
        %v1651 = vpop.f32.mrb[0].mxu0
        %1652 = vdwg.mxu0
        %v1654 = vsel %vm317, %v1539, 0
        %1656 = vmatprep.subr.bf16.mxu0 0
        %1657 = vmatpush1.bf16.msra.mxu0 %v1547
        %1658 = vmatprep.subr.bf16.mxu0 0
        %1659 = vmatpush1.bf16.msra.mxu0 0
        %1660 = vmatprep.subr.bf16.mxu0 0
        %1661 = vmatpush1.bf16.msra.mxu0 0
        %1662 = vmatprep.subr.bf16.mxu0 0
        %1663 = vmatpush1.bf16.msra.mxu0 0
        %1664 = vmatprep.subr.bf16.mxu0 0
        %1665 = vmatpush1.bf16.msra.mxu0 0
        %1666 = vmatprep.subr.bf16.mxu0 0
        %1667 = vmatpush1.bf16.msra.mxu0 0
        %1668 = vmatprep.subr.bf16.mxu0 0
        %1669 = vmatpush1.bf16.msra.mxu0 0
        %1670 = vmatprep.subr.bf16.mxu0 0
        %1671 = vmatpush1.bf16.msra.mxu0 0
        %1672 = vmatprep.subr.bf16.mxu0 0
        %1673 = vmatpush1.bf16.msra.mxu0 0
        %1674 = vmatprep.subr.bf16.mxu0 0
        %1675 = vmatpush1.bf16.msra.mxu0 0
        %1676 = vmatprep.subr.bf16.mxu0 0
        %1677 = vmatpush1.bf16.msra.mxu0 0
        %1678 = vmatprep.subr.bf16.mxu0 0
        %1679 = vmatpush1.bf16.msra.mxu0 0
        %1680 = vmatprep.subr.bf16.mxu0 0
        %1681 = vmatpush1.bf16.msra.mxu0 0
        %1682 = vmatprep.subr.bf16.mxu0 0
        %1683 = vmatpush1.bf16.msra.mxu0 0
        %1684 = vmatprep.subr.bf16.mxu0 0
        %1685 = vmatpush1.bf16.msra.mxu0 0
        %1686 = vmatprep.subr.bf16.mxu0 0
        %1687 = vmatpush1.bf16.msra.mxu0 0
        %1688 = vmatprep.mubr.bf16.mxu0 0
        %1689 = vmatmul.mubr.bf16.gmra.mrb[0].mxu0 %v1654
        %v1690 = vpop.f32.mrb[0].mxu0
        %v1691 = vadd.f32 %v1577, %v1690
        %v1692 = vpop.f32.mrb[0].mxu0
        %v1693 = vpop.f32.mrb[0].mxu0
        %v1694 = vpop.f32.mrb[0].mxu0
        %1695 = vdwg.mxu0
        %v1697 = vsel %vm317, %v1540, 0
        %1699 = vmatprep.subr.bf16.mxu0 0
        %1700 = vmatpush1.bf16.msra.mxu0 %v1548
        %1701 = vmatprep.subr.bf16.mxu0 0
        %1702 = vmatpush1.bf16.msra.mxu0 0
        %1703 = vmatprep.subr.bf16.mxu0 0
        %1704 = vmatpush1.bf16.msra.mxu0 0
        %1705 = vmatprep.subr.bf16.mxu0 0
        %1706 = vmatpush1.bf16.msra.mxu0 0
        %1707 = vmatprep.subr.bf16.mxu0 0
        %1708 = vmatpush1.bf16.msra.mxu0 0
        %1709 = vmatprep.subr.bf16.mxu0 0
        %1710 = vmatpush1.bf16.msra.mxu0 0
        %1711 = vmatprep.subr.bf16.mxu0 0
        %1712 = vmatpush1.bf16.msra.mxu0 0
        %1713 = vmatprep.subr.bf16.mxu0 0
        %1714 = vmatpush1.bf16.msra.mxu0 0
        %1715 = vmatprep.subr.bf16.mxu0 0
        %1716 = vmatpush1.bf16.msra.mxu0 0
        %1717 = vmatprep.subr.bf16.mxu0 0
        %1718 = vmatpush1.bf16.msra.mxu0 0
        %1719 = vmatprep.subr.bf16.mxu0 0
        %1720 = vmatpush1.bf16.msra.mxu0 0
        %1721 = vmatprep.subr.bf16.mxu0 0
        %1722 = vmatpush1.bf16.msra.mxu0 0
        %1723 = vmatprep.subr.bf16.mxu0 0
        %1724 = vmatpush1.bf16.msra.mxu0 0
        %1725 = vmatprep.subr.bf16.mxu0 0
        %1726 = vmatpush1.bf16.msra.mxu0 0
        %1727 = vmatprep.subr.bf16.mxu0 0
        %1728 = vmatpush1.bf16.msra.mxu0 0
        %1729 = vmatprep.subr.bf16.mxu0 0
        %1730 = vmatpush1.bf16.msra.mxu0 0
        %1731 = vmatprep.mubr.bf16.mxu0 0
        %1732 = vmatmul.mubr.bf16.gmra.mrb[0].mxu0 %v1697
        %v1733 = vpop.f32.mrb[0].mxu0
        %v1734 = vadd.f32 %v1581, %v1733
        %v1735 = vpop.f32.mrb[0].mxu0
        %v1736 = vpop.f32.mrb[0].mxu0
        %v1737 = vpop.f32.mrb[0].mxu0
        %1738 = vdwg.mxu0
        %v1740 = vsel %vm317, %v1541, 0
        %1742 = vmatprep.subr.bf16.mxu0 0
        %1743 = vmatpush1.bf16.msra.mxu0 %v1549
        %1744 = vmatprep.subr.bf16.mxu0 0
        %1745 = vmatpush1.bf16.msra.mxu0 0
        %1746 = vmatprep.subr.bf16.mxu0 0
        %1747 = vmatpush1.bf16.msra.mxu0 0
        %1748 = vmatprep.subr.bf16.mxu0 0
        %1749 = vmatpush1.bf16.msra.mxu0 0
        %1750 = vmatprep.subr.bf16.mxu0 0
        %1751 = vmatpush1.bf16.msra.mxu0 0
        %1752 = vmatprep.subr.bf16.mxu0 0
        %1753 = vmatpush1.bf16.msra.mxu0 0
        %1754 = vmatprep.subr.bf16.mxu0 0
        %1755 = vmatpush1.bf16.msra.mxu0 0
        %1756 = vmatprep.subr.bf16.mxu0 0
        %1757 = vmatpush1.bf16.msra.mxu0 0
        %1758 = vmatprep.subr.bf16.mxu0 0
        %1759 = vmatpush1.bf16.msra.mxu0 0
        %1760 = vmatprep.subr.bf16.mxu0 0
        %1761 = vmatpush1.bf16.msra.mxu0 0
        %1762 = vmatprep.subr.bf16.mxu0 0
        %1763 = vmatpush1.bf16.msra.mxu0 0
        %1764 = vmatprep.subr.bf16.mxu0 0
        %1765 = vmatpush1.bf16.msra.mxu0 0
        %1766 = vmatprep.subr.bf16.mxu0 0
        %1767 = vmatpush1.bf16.msra.mxu0 0
        %1768 = vmatprep.subr.bf16.mxu0 0
        %1769 = vmatpush1.bf16.msra.mxu0 0
        %1770 = vmatprep.subr.bf16.mxu0 0
        %1771 = vmatpush1.bf16.msra.mxu0 0
        %1772 = vmatprep.subr.bf16.mxu0 0
        %1773 = vmatpush1.bf16.msra.mxu0 0
        %1774 = vmatprep.mubr.bf16.mxu0 0
        %1775 = vmatmul.mubr.bf16.gmra.mrb[0].mxu0 %v1740
        %v1776 = vpop.f32.mrb[0].mxu0
        %v1777 = vadd.f32 %v1585, %v1776
        %v1778 = vpop.f32.mrb[0].mxu0
        %v1779 = vpop.f32.mrb[0].mxu0
        %v1780 = vpop.f32.mrb[0].mxu0
        %1781 = vdwg.mxu0
        %v1783 = vsel %vm317, %v1542, 0
        %1785 = vmatprep.subr.bf16.mxu0 0
        %1786 = vmatpush1.bf16.msra.mxu0 %v1550
        %1787 = vmatprep.subr.bf16.mxu0 0
        %1788 = vmatpush1.bf16.msra.mxu0 0
        %1789 = vmatprep.subr.bf16.mxu0 0
        %1790 = vmatpush1.bf16.msra.mxu0 0
        %1791 = vmatprep.subr.bf16.mxu0 0
        %1792 = vmatpush1.bf16.msra.mxu0 0
        %1793 = vmatprep.subr.bf16.mxu0 0
        %1794 = vmatpush1.bf16.msra.mxu0 0
        %1795 = vmatprep.subr.bf16.mxu0 0
        %1796 = vmatpush1.bf16.msra.mxu0 0
        %1797 = vmatprep.subr.bf16.mxu0 0
        %1798 = vmatpush1.bf16.msra.mxu0 0
        %1799 = vmatprep.subr.bf16.mxu0 0
        %1800 = vmatpush1.bf16.msra.mxu0 0
        %1801 = vmatprep.subr.bf16.mxu0 0
        %1802 = vmatpush1.bf16.msra.mxu0 0
        %1803 = vmatprep.subr.bf16.mxu0 0
        %1804 = vmatpush1.bf16.msra.mxu0 0
        %1805 = vmatprep.subr.bf16.mxu0 0
        %1806 = vmatpush1.bf16.msra.mxu0 0
        %1807 = vmatprep.subr.bf16.mxu0 0
        %1808 = vmatpush1.bf16.msra.mxu0 0
        %1809 = vmatprep.subr.bf16.mxu0 0
        %1810 = vmatpush1.bf16.msra.mxu0 0
        %1811 = vmatprep.subr.bf16.mxu0 0
        %1812 = vmatpush1.bf16.msra.mxu0 0
        %1813 = vmatprep.subr.bf16.mxu0 0
        %1814 = vmatpush1.bf16.msra.mxu0 0
        %1815 = vmatprep.subr.bf16.mxu0 0
        %1816 = vmatpush1.bf16.msra.mxu0 0
        %1817 = vmatprep.mubr.bf16.mxu0 0
        %1818 = vmatmul.mubr.bf16.gmra.mrb[0].mxu0 %v1783
        %v1819 = vpop.f32.mrb[0].mxu0
        %v1820 = vadd.f32 %v1589, %v1819
        %v1821 = vpop.f32.mrb[0].mxu0
        %v1822 = vpop.f32.mrb[0].mxu0
        %v1823 = vpop.f32.mrb[0].mxu0
        %1824 = vdwg.mxu0
        %v1826 = vsel %vm317, %v1543, 0
        %1828 = vmatprep.subr.bf16.mxu0 0
        %1829 = vmatpush1.bf16.msra.mxu0 %v1551
        %1830 = vmatprep.subr.bf16.mxu0 0
        %1831 = vmatpush1.bf16.msra.mxu0 0
        %1832 = vmatprep.subr.bf16.mxu0 0
        %1833 = vmatpush1.bf16.msra.mxu0 0
        %1834 = vmatprep.subr.bf16.mxu0 0
        %1835 = vmatpush1.bf16.msra.mxu0 0
        %1836 = vmatprep.subr.bf16.mxu0 0
        %1837 = vmatpush1.bf16.msra.mxu0 0
        %1838 = vmatprep.subr.bf16.mxu0 0
        %1839 = vmatpush1.bf16.msra.mxu0 0
        %1840 = vmatprep.subr.bf16.mxu0 0
        %1841 = vmatpush1.bf16.msra.mxu0 0
        %1842 = vmatprep.subr.bf16.mxu0 0
        %1843 = vmatpush1.bf16.msra.mxu0 0
        %1844 = vmatprep.subr.bf16.mxu0 0
        %1845 = vmatpush1.bf16.msra.mxu0 0
        %1846 = vmatprep.subr.bf16.mxu0 0
        %1847 = vmatpush1.bf16.msra.mxu0 0
        %1848 = vmatprep.subr.bf16.mxu0 0
        %1849 = vmatpush1.bf16.msra.mxu0 0
        %1850 = vmatprep.subr.bf16.mxu0 0
        %1851 = vmatpush1.bf16.msra.mxu0 0
        %1852 = vmatprep.subr.bf16.mxu0 0
        %1853 = vmatpush1.bf16.msra.mxu0 0
        %1854 = vmatprep.subr.bf16.mxu0 0
        %1855 = vmatpush1.bf16.msra.mxu0 0
        %1856 = vmatprep.subr.bf16.mxu0 0
        %1857 = vmatpush1.bf16.msra.mxu0 0
        %1858 = vmatprep.subr.bf16.mxu0 0
        %1859 = vmatpush1.bf16.msra.mxu0 0
        %1860 = vmatprep.mubr.bf16.mxu0 0
        %1861 = vmatmul.mubr.bf16.gmra.mrb[0].mxu0 %v1826
        %v1862 = vpop.f32.mrb[0].mxu0
        %v1863 = vadd.f32 %v1593, %v1862
        %v1864 = vpop.f32.mrb[0].mxu0
        %v1865 = vpop.f32.mrb[0].mxu0
        %v1866 = vpop.f32.mrb[0].mxu0
        %1867 = vdwg.mxu0
        %v1869 = vsel %vm317, %v1544, 0
        %1871 = vmatprep.subr.bf16.mxu0 0
        %1872 = vmatpush1.bf16.msra.mxu0 %v1552
        %1873 = vmatprep.subr.bf16.mxu0 0
        %1874 = vmatpush1.bf16.msra.mxu0 0
        %1875 = vmatprep.subr.bf16.mxu0 0
        %1876 = vmatpush1.bf16.msra.mxu0 0
        %1877 = vmatprep.subr.bf16.mxu0 0
        %1878 = vmatpush1.bf16.msra.mxu0 0
        %1879 = vmatprep.subr.bf16.mxu0 0
        %1880 = vmatpush1.bf16.msra.mxu0 0
        %1881 = vmatprep.subr.bf16.mxu0 0
        %1882 = vmatpush1.bf16.msra.mxu0 0
        %1883 = vmatprep.subr.bf16.mxu0 0
        %1884 = vmatpush1.bf16.msra.mxu0 0
        %1885 = vmatprep.subr.bf16.mxu0 0
        %1886 = vmatpush1.bf16.msra.mxu0 0
        %1887 = vmatprep.subr.bf16.mxu0 0
        %1888 = vmatpush1.bf16.msra.mxu0 0
        %1889 = vmatprep.subr.bf16.mxu0 0
        %1890 = vmatpush1.bf16.msra.mxu0 0
        %1891 = vmatprep.subr.bf16.mxu0 0
        %1892 = vmatpush1.bf16.msra.mxu0 0
        %1893 = vmatprep.subr.bf16.mxu0 0
        %1894 = vmatpush1.bf16.msra.mxu0 0
        %1895 = vmatprep.subr.bf16.mxu0 0
        %1896 = vmatpush1.bf16.msra.mxu0 0
        %1897 = vmatprep.subr.bf16.mxu0 0
        %1898 = vmatpush1.bf16.msra.mxu0 0
        %1899 = vmatprep.subr.bf16.mxu0 0
        %1900 = vmatpush1.bf16.msra.mxu0 0
        %1901 = vmatprep.subr.bf16.mxu0 0
        %1902 = vmatpush1.bf16.msra.mxu0 0
        %1903 = vmatprep.mubr.bf16.mxu0 0
        %1904 = vmatmul.mubr.bf16.gmra.mrb[0].mxu0 %v1869
        %v1905 = vpop.f32.mrb[0].mxu0
        %v1906 = vadd.f32 %v1597, %v1905
        %v1907 = vpop.f32.mrb[0].mxu0
        %v1908 = vpop.f32.mrb[0].mxu0
        %v1909 = vpop.f32.mrb[0].mxu0
        %1910 = vdwg.mxu0
        %v1912 = vsel %vm317, %v1545, 0
        %1914 = vmatprep.subr.bf16.mxu0 0
        %1915 = vmatpush1.bf16.msra.mxu0 %v1553
        %1916 = vmatprep.subr.bf16.mxu0 0
        %1917 = vmatpush1.bf16.msra.mxu0 0
        %1918 = vmatprep.subr.bf16.mxu0 0
        %1919 = vmatpush1.bf16.msra.mxu0 0
        %1920 = vmatprep.subr.bf16.mxu0 0
        %1921 = vmatpush1.bf16.msra.mxu0 0
        %1922 = vmatprep.subr.bf16.mxu0 0
        %1923 = vmatpush1.bf16.msra.mxu0 0
        %1924 = vmatprep.subr.bf16.mxu0 0
        %1925 = vmatpush1.bf16.msra.mxu0 0
        %1926 = vmatprep.subr.bf16.mxu0 0
        %1927 = vmatpush1.bf16.msra.mxu0 0
        %1928 = vmatprep.subr.bf16.mxu0 0
        %1929 = vmatpush1.bf16.msra.mxu0 0
        %1930 = vmatprep.subr.bf16.mxu0 0
        %1931 = vmatpush1.bf16.msra.mxu0 0
        %1932 = vmatprep.subr.bf16.mxu0 0
        %1933 = vmatpush1.bf16.msra.mxu0 0
        %1934 = vmatprep.subr.bf16.mxu0 0
        %1935 = vmatpush1.bf16.msra.mxu0 0
        %1936 = vmatprep.subr.bf16.mxu0 0
        %1937 = vmatpush1.bf16.msra.mxu0 0
        %1938 = vmatprep.subr.bf16.mxu0 0
        %1939 = vmatpush1.bf16.msra.mxu0 0
        %1940 = vmatprep.subr.bf16.mxu0 0
        %1941 = vmatpush1.bf16.msra.mxu0 0
        %1942 = vmatprep.subr.bf16.mxu0 0
        %1943 = vmatpush1.bf16.msra.mxu0 0
        %1944 = vmatprep.subr.bf16.mxu0 0
        %1945 = vmatpush1.bf16.msra.mxu0 0
        %1946 = vmatprep.mubr.bf16.mxu0 0
        %1947 = vmatmul.mubr.bf16.gmra.mrb[0].mxu0 %v1912
        %v1948 = vpop.f32.mrb[0].mxu0
        %v1949 = vadd.f32 %v1601, %v1948
        %v1950 = vpop.f32.mrb[0].mxu0
        %v1951 = vpop.f32.mrb[0].mxu0
        %v1952 = vpop.f32.mrb[0].mxu0
        %1953 = vdwg.mxu0
        %v1954 = vmax.f32 %v1648, 0.0
        %v1955 = vmax.f32 %v1691, 0.0
        %v1956 = vmax.f32 %v1734, 0.0
        %v1957 = vmax.f32 %v1777, 0.0
        %v1958 = vmax.f32 %v1820, 0.0
        %v1959 = vmax.f32 %v1863, 0.0
        %v1960 = vmax.f32 %v1906, 0.0
        %v1961 = vmax.f32 %v1949, 0.0
        %1962 = vst.msk [vmem:[%s278] sm:$0xff] %vm1079, %v1954
        %1963 = vst.msk [vmem:[%s278 + $0x8] sm:$0xff] %vm1079, %v1955
        %1964 = vst.msk [vmem:[%s278 + $0x10] sm:$0xff] %vm1079, %v1956
        %1965 = vst.msk [vmem:[%s278 + $0x18] sm:$0xff] %vm1079, %v1957
        %1966 = vst.msk [vmem:[%s278 + $0x20] sm:$0xff] %vm1079, %v1958
        %1967 = vst.msk [vmem:[%s278 + $0x28] sm:$0xff] %vm1079, %v1959
        %1968 = vst.msk [vmem:[%s278 + $0x30] sm:$0xff] %vm1079, %v1960
        %1969 = vst.msk [vmem:[%s278 + $0x38] sm:$0xff] %vm1079, %v1961
        %s1970 = sand.u32 %s183, 1
        %s1971 = sand.u32 %s183, 1
        %s1972 = smul.addr %s1971, 64
        %s1973 = scalar_lea.vmem [#allocation2], %s1972
        // Predicated region
        $region49: #{tpu_custom_call.1} parent=47 // pred_check
          %p1974 = pneg %p193
        $region50: #{tpu_custom_call.1} parent=47 // pred_check_branch
          %1976 = sbr.rel (%p1974) target = $region52
        $region51: #{tpu_custom_call.1} parent=47 // pred_region
          %s1977 = smul.addr %s18, 8
          %s1978 = scalar_lea.vmem %s7, %s1977
          // Predicated region
          $region53: #{tpu_custom_call.1} parent=51 // pred_check
            _
          $region54: #{tpu_custom_call.1} parent=51 // pred_check_branch
            %1980 = sbr.rel (0) target = $region56
          $region55: #{tpu_custom_call.1} parent=51 // pred_region
            // Predicated region
            $region57: #{tpu_custom_call.1} parent=55 // pred_check
              _
            $region58: #{tpu_custom_call.1} parent=55 // pred_check_branch
              %1982 = sbr.rel (0) target = $region60
            $region59: #{tpu_custom_call.1} parent=55 // pred_region
              // Predicated region
              $region72: #{tpu_custom_call.1} parent=59 // pred_check
                _
              $region73: #{tpu_custom_call.1} parent=59 // pred_check_branch
                %2011 = sbr.rel (0) target = $region75
              $region74: #{tpu_custom_call.1} parent=59 // pred_region
                loop: start=0, step=1, limit=1
                $region76: #{tpu_custom_call.1} parent=74 // loop_pre_header
                  _
                $region77: #{tpu_custom_call.1} parent=74 // loop_header
                  %s2013 = sphi 0, %s2017
                  %p2014 = scmp.ge.s32.totalorder %s2013, 1
                  %s2018 = sphi %s1973, %s1973
                  %s2019 = sphi %s1978, %s1978
                $region78: #{tpu_custom_call.1} parent=74 // loop_header_branch
                  %2016 = sbr.rel (%p2014) target = $region82
                $region79: #{tpu_custom_call.1} parent=74 // loop_body
                  %v2020 = vld [vmem:[%s2018] sm:$0xff]
                  %2021 = vst [vmem:[%s2019] sm:$0xff] %v2020
                  %v2022 = vld [vmem:[%s2018 + $0x8] sm:$0xff]
                  %2023 = vst [vmem:[%s2019 + $0x10] sm:$0xff] %v2022
                  %v2024 = vld [vmem:[%s2018 + $0x10] sm:$0xff]
                  %2025 = vst [vmem:[%s2019 + $0x20] sm:$0xff] %v2024
                  %v2026 = vld [vmem:[%s2018 + $0x18] sm:$0xff]
                  %2027 = vst [vmem:[%s2019 + $0x30] sm:$0xff] %v2026
                  %v2028 = vld [vmem:[%s2018 + $0x20] sm:$0xff]
                  %2029 = vst [vmem:[%s2019 + $0x40] sm:$0xff] %v2028
                  %v2030 = vld [vmem:[%s2018 + $0x28] sm:$0xff]
                  %2031 = vst [vmem:[%s2019 + $0x50] sm:$0xff] %v2030
                  %v2032 = vld [vmem:[%s2018 + $0x30] sm:$0xff]
                  %2033 = vst [vmem:[%s2019 + $0x60] sm:$0xff] %v2032
                  %v2034 = vld [vmem:[%s2018 + $0x38] sm:$0xff]
                  %2035 = vst [vmem:[%s2019 + $0x70] sm:$0xff] %v2034
                $region80: #{tpu_custom_call.1} parent=74 // loop_footer
                  %s2017 = sadd.s32 1, %s2013
                $region81: #{tpu_custom_call.1} parent=74 // loop_footer_branch
                  %2012 = sbr.rel target = $region77
                $region82: #{tpu_custom_call.1} parent=74 // loop_exit
                  _
              $region75: #{tpu_custom_call.1} parent=59 // pred_fallthru
                _
              // Predicated region
              $region83: #{tpu_custom_call.1} parent=59 // pred_check
                _
              $region84: #{tpu_custom_call.1} parent=59 // pred_check_branch
                %2037 = sbr.rel target = $region86
              $region85: #{tpu_custom_call.1} parent=59 // pred_region
                _
              $region86: #{tpu_custom_call.1} parent=59 // pred_fallthru
                _
            $region60: #{tpu_custom_call.1} parent=55 // pred_fallthru
              _
            // Predicated region
            $region61: #{tpu_custom_call.1} parent=55 // pred_check
              _
            $region62: #{tpu_custom_call.1} parent=55 // pred_check_branch
              %1984 = sbr.rel target = $region64
            $region63: #{tpu_custom_call.1} parent=55 // pred_region
              loop: start=0, step=1, limit=1
              $region65: #{tpu_custom_call.1} parent=63 // loop_pre_header
                _
              $region66: #{tpu_custom_call.1} parent=63 // loop_header
                %s1987 = sphi 0, %s1991
                %p1988 = scmp.ge.s32.totalorder %s1987, 1
                %s1992 = sphi %s1973, %s1973
                %s1993 = sphi %s1978, %s1978
              $region67: #{tpu_custom_call.1} parent=63 // loop_header_branch
                %1990 = sbr.rel (%p1988) target = $region71
              $region68: #{tpu_custom_call.1} parent=63 // loop_body
                %v1994 = vld [vmem:[%s1992] sm:$0xff]
                %1995 = vst [vmem:[%s1993] sm:$0xff] %v1994
                %v1996 = vld [vmem:[%s1992 + $0x8] sm:$0xff]
                %1997 = vst [vmem:[%s1993 + $0x10] sm:$0xff] %v1996
                %v1998 = vld [vmem:[%s1992 + $0x10] sm:$0xff]
                %1999 = vst [vmem:[%s1993 + $0x20] sm:$0xff] %v1998
                %v2000 = vld [vmem:[%s1992 + $0x18] sm:$0xff]
                %2001 = vst [vmem:[%s1993 + $0x30] sm:$0xff] %v2000
                %v2002 = vld [vmem:[%s1992 + $0x20] sm:$0xff]
                %2003 = vst [vmem:[%s1993 + $0x40] sm:$0xff] %v2002
                %v2004 = vld [vmem:[%s1992 + $0x28] sm:$0xff]
                %2005 = vst [vmem:[%s1993 + $0x50] sm:$0xff] %v2004
                %v2006 = vld [vmem:[%s1992 + $0x30] sm:$0xff]
                %2007 = vst [vmem:[%s1993 + $0x60] sm:$0xff] %v2006
                %v2008 = vld [vmem:[%s1992 + $0x38] sm:$0xff]
                %2009 = vst [vmem:[%s1993 + $0x70] sm:$0xff] %v2008
              $region69: #{tpu_custom_call.1} parent=63 // loop_footer
                %s1991 = sadd.s32 1, %s1987
              $region70: #{tpu_custom_call.1} parent=63 // loop_footer_branch
                %1986 = sbr.rel target = $region66
              $region71: #{tpu_custom_call.1} parent=63 // loop_exit
                _
            $region64: #{tpu_custom_call.1} parent=55 // pred_fallthru
              _
          $region56: #{tpu_custom_call.1} parent=51 // pred_fallthru
            _
          %2038 = vnop
        $region52: #{tpu_custom_call.1} parent=47 // pred_fallthru
          _
      $region48: #{tpu_custom_call.1} parent=5 // pred_fallthru
        _
      %p2039 = scmp.le.s32.totalorder 2, %s13
      // Predicated region
      $region87: #{tpu_custom_call.1} parent=5 // pred_check
        %p2040 = pneg %p2039
      $region88: #{tpu_custom_call.1} parent=5 // pred_check_branch
        %2042 = sbr.rel (%p2040) target = $region90
      $region89: #{tpu_custom_call.1} parent=5 // pred_region
        %s2043 = ssub.s32 %s13, 2
        // Predicated region
        $region91: #{tpu_custom_call.1} parent=89 // pred_check
          %p2044 = pneg %p199
        $region92: #{tpu_custom_call.1} parent=89 // pred_check_branch
          %2046 = sbr.rel (%p2044) target = $region94
        $region93: #{tpu_custom_call.1} parent=89 // pred_region
          %s2047 = sand.u32 %s184, 1
          %s2048 = sand.u32 %s184, 1
          %s2049 = smul.addr %s2048, 64
          %s2050 = scalar_lea.vmem [#allocation2], %s2049
        $region94: #{tpu_custom_call.1} parent=89 // pred_fallthru
          _
      $region90: #{tpu_custom_call.1} parent=5 // pred_fallthru
        _
    $region6: #{tpu_custom_call.1} parent=1 // loop_footer
      %s17 = sadd.s32 1, %s13
    $region7: #{tpu_custom_call.1} parent=1 // loop_footer_branch
      %12 = sbr.rel target = $region3
    $region8: #{tpu_custom_call.1} parent=1 // loop_exit
      _

</llo_original>
